<compile_context>
chip_gen: v7x
topology: tpu7x:2x2x1
jax: 0.10.0
libtpu: 0.0.40
codegen_flags: <defaults>
</compile_context>

<pallas_src>
import functools

import jax
import jax.numpy as jnp
import numpy as np
from jax import lax
from jax.experimental import pallas as pl
from jax.experimental.pallas import tpu as pltpu


def _round_up(x, m):
    return (x + m - 1) // m * m


# ----------------------------------------------------------------------------
# Median selection network (built once per kernel size at trace time, cached).
# ----------------------------------------------------------------------------
def _oddeven_merge(lo, hi, r):
    step = r * 2
    if step < hi - lo:
        yield from _oddeven_merge(lo, hi, step)
        yield from _oddeven_merge(lo + r, hi, step)
        for i in range(lo + r, hi - r, step):
            yield (i, i + r)
    else:
        yield (lo, lo + r)


def _oddeven_merge_sort_range(lo, hi):
    if (hi - lo) >= 1:
        mid = lo + ((hi - lo) // 2)
        yield from _oddeven_merge_sort_range(lo, mid)
        yield from _oddeven_merge_sort_range(mid + 1, hi)
        yield from _oddeven_merge(lo, hi, 1)


def _batcher_comparators(n):
    """Batcher odd-even mergesort network for n a power of two (ascending)."""
    return list(_oddeven_merge_sort_range(0, n - 1))


@functools.lru_cache(maxsize=None)
def _median_network(k):
    """Pruned min/max network computing the lower median (sorted index (k-1)//2,
    matching torch.median for even k).  Returns (comparators, out_idx) with
    comparators a tuple of (i, j, need_min, need_max) applied in order."""
    p = 1
    while p < k:
        p *= 2
    comps = _batcher_comparators(p)
    # Sentinel wires >= k conceptually hold +inf on the top wires of an
    # ascending network, so comparators touching them are no-ops -> drop.
    comps = [(i, j) for (i, j) in comps if j < k]
    mid = (k - 1) // 2
    # Backward pruning: keep only comparators that can influence output `mid`.
    needed = {mid}
    kept = []
    for (i, j) in reversed(comps):
        need_min = i in needed
        need_max = j in needed
        if need_min or need_max:
            kept.append((i, j, need_min, need_max))
            needed.add(i)
            needed.add(j)
    kept.reverse()
    kept = tuple(kept)

    # Trace-time sanity check against numpy (includes ties).
    rng = np.random.RandomState(0)
    for _ in range(50):
        vals = rng.randint(0, max(2, k // 2), size=k).astype(np.float64)
        wires = list(vals)
        for (i, j, nmin, nmax) in kept:
            a, b = wires[i], wires[j]
            if nmin:
                wires[i] = min(a, b)
            if nmax:
                wires[j] = max(a, b)
        assert wires[mid] == np.sort(vals)[mid], "median network self-check failed"
    return kept, mid


# ----------------------------------------------------------------------------
# Kernel
# ----------------------------------------------------------------------------
def _make_hpss_kernel(Ft, Tt, kf, kt, power, hard, eps, mask_only):
    TS = 128                                  # (8,128) f32 sub-tile = 1 vreg/wire
    off_f, off_t = kf // 2, kt // 2
    halo_f = _round_up(kf - 1, 8)             # sublane-rounded freq halo
    halo_t = _round_up(kt - 1, 128)           # lane-rounded time halo
    Fsup = Ft + halo_f                        # superblock rows  (multiple of 8)
    Tsup = Tt + halo_t                        # superblock cols  (multiple of 128)
    strip_rows = 8 + halo_f                   # rows needed per 8-row output strip
    perc_net, perc_mid = _median_network(kf)
    harm_net, harm_mid = _median_network(kt)
    n_out = 2 if mask_only else 4

    def _median(wires, net, mid):
        wires = list(wires)
        for (i, j, need_min, need_max) in net:
            a, b = wires[i], wires[j]
            if need_min:
                wires[i] = jnp.minimum(a, b)
            if need_max:
                wires[j] = jnp.maximum(a, b)
        return wires[mid]

    def kernel(x_hbm, *rest):
        out_refs, (sup, sem) = rest[:n_out], rest[n_out:]
        if mask_only:
            mh_ref, mp_ref = out_refs
        else:
            oh_ref, op_ref, mh_ref, mp_ref = out_refs

        n = pl.program_id(0)
        f0 = pl.multiple_of(pl.program_id(1) * Ft, 8)
        t0 = pl.multiple_of(pl.program_id(2) * Tt, 128)

        # One aligned (Fsup, Tsup) superblock per grid step (only a few hundred
        # KiB).  Sync copy; the median compute dominates by >10x.
        cp = pltpu.make_async_copy(
            x_hbm.at[n, pl.ds(f0, Fsup), pl.ds(t0, Tsup)], sup, sem.at[0])
        cp.start()
        cp.wait()

        def strip_body(s, carry):
            fr = pl.multiple_of(s * 8, 8)     # 8-aligned output strip start
            for tc in range(0, Tt, TS):       # static; at most Tt/128 <= 4 chunks
                # Haloed window for this (8-row, 128-col) output sub-tile:
                # ~(40, 256) f32 -> ~10 vregs; all further slicing is static and
                # stays at vreg scale (no whole-chunk shifted copies).
                rows = sup[pl.ds(fr, strip_rows),
                           tc:tc + TS + halo_t].astype(jnp.float32)

                # Percussive-enhanced: median over a freq window of size kf.
                perc = _median(
                    [rows[df:df + 8, off_t:off_t + TS] for df in range(kf)],
                    perc_net, perc_mid)
                # Harmonic-enhanced: median over a time window of size kt.
                rows_h = rows[off_f:off_f + 8, :]
                harm = _median(
                    [rows_h[:, dt:dt + TS] for dt in range(kt)],
                    harm_net, harm_mid)

                if power == 2.0:
                    perc = perc * perc
                    harm = harm * harm
                elif power != 1.0:
                    perc = perc ** power
                    harm = harm ** power

                if hard:
                    # TODO(synk): torch returns bool masks; we emit {0,1} floats
                    # (strict >/< so ties zero both masks, exactly like torch).
                    mh = (harm > perc).astype(jnp.float32)
                    mp = (harm < perc).astype(jnp.float32)
                else:
                    den = harm + perc + eps
                    inv = pl.reciprocal(den, approx=True)   # EUP slot (VALU is
                    inv = inv * (2.0 - den * inv)           # the bottleneck);
                    mh = (harm + eps) * inv                 # +1 Newton step.
                    mp = (perc + eps) * inv

                mh_ref[pl.ds(fr, 8), tc:tc + TS] = mh.astype(mh_ref.dtype)
                mp_ref[pl.ds(fr, 8), tc:tc + TS] = mp.astype(mp_ref.dtype)
                if not mask_only:
                    mag = rows[off_f:off_f + 8, off_t:off_t + TS]
                    oh_ref[pl.ds(fr, 8), tc:tc + TS] = (mag * mh).astype(oh_ref.dtype)
                    op_ref[pl.ds(fr, 8), tc:tc + TS] = (mag * mp).astype(op_ref.dtype)
            return carry

        lax.fori_loop(0, Ft // 8, strip_body, 0)

    return kernel, Fsup, Tsup


# ----------------------------------------------------------------------------
# Wrapper
# ----------------------------------------------------------------------------
def hpss_pallas(mag_specgrams, kernel_size=31, power=2.0, hard=False,
                mask_only=False):
    """Pallas implementation of `hpss` (forward only).

    mag_specgrams: (batch, ch, freq, time), non-negative magnitudes.
    Returns (harm_part, perc_part, mask_harm, mask_perc); first two are None
    when mask_only=True (matching the torch reference).
    """
    if isinstance(kernel_size, int):
        kf = kt = kernel_size
    else:
        kf, kt = kernel_size
        # TODO(synk): the torch reference only shape-checks for kf == kt (its
        # pad/offset bookkeeping mixes the two); only equal sizes supported.
        assert kf == kt, "only equal kernel sizes supported"

    eps = 1e-6
    B, C, F, T = mag_specgrams.shape
    N = B * C
    off_f, off_t = kf // 2, kt // 2
    if off_f >= F or off_t >= T:
        raise ValueError(
            "reflect padding requires kernel_size//2 < freq and time dims "
            f"(got kernel_size={kernel_size}, freq={F}, time={T})")

    dtype = mag_specgrams.dtype
    itemsize = np.dtype(dtype).itemsize

    # ---- Tile selection (a few MiB of VMEM -> fits v5e/v6e/v7x alike). ----
    F8 = _round_up(F, 8)
    n_ft = -(-F8 // 256)                      # target <= 256 freq rows per tile
    Ft = _round_up(-(-F8 // n_ft), 8)
    F_pad = n_ft * Ft

    T_pad = _round_up(T, 128)
    m128 = T_pad // 128
    d = max(dd for dd in (4, 3, 2, 1) if m128 % dd == 0)
    Tt = 128 * d                              # <= 512, divides T_pad exactly
    n_tt = T_pad // Tt

    kernel, Fsup, Tsup = _make_hpss_kernel(Ft, Tt, kf, kt, power, hard, eps,
                                           mask_only)

    Fp_full = F_pad + _round_up(kf - 1, 8)
    Tp_full = T_pad + _round_up(kt - 1, 128)

    # Reflect padding (same semantics as torch F.pad(mode='reflect')), then a
    # zero tail so every superblock DMA stays in bounds.  The zero tail only
    # feeds out-of-range output rows/cols which Pallas masks on writeback
    # (outputs are exact-shaped: no post-kernel crop copy).
    x = mag_specgrams.reshape(N, F, T)
    xp = jnp.pad(x, ((0, 0), (off_f, off_f), (off_t, off_t)), mode="reflect")
    xp = jnp.pad(xp, ((0, 0),
                      (0, Fp_full - xp.shape[1]),
                      (0, Tp_full - xp.shape[2])))

    n_out = 2 if mask_only else 4
    out_struct = jax.ShapeDtypeStruct((N, F, T), dtype)

    # VMEM budget: superblock scratch + double-buffered output blocks + headroom,
    # capped well below v7x's 64 MiB physical VMEM.
    req = Fsup * Tsup * itemsize + n_out * 2 * Ft * Tt * itemsize
    vmem_limit = int(min(48 * 1024 * 1024, 16 * 1024 * 1024 + 2 * req))

    outs = pl.pallas_call(
        kernel,
        out_shape=(out_struct,) * n_out,
        grid=(N, n_ft, n_tt),
        in_specs=[pl.BlockSpec(memory_space=pl.ANY)],     # raw HBM; manual DMA
        out_specs=tuple(
            pl.BlockSpec((None, Ft, Tt), lambda n, fi, ti: (n, fi, ti))
            for _ in range(n_out)),
        scratch_shapes=[
            pltpu.VMEM((Fsup, Tsup), dtype),
            pltpu.SemaphoreType.DMA((1,)),
        ],
        compiler_params=pltpu.CompilerParams(
            dimension_semantics=("parallel", "parallel", "parallel"),
            vmem_limit_bytes=vmem_limit),
    )(xp)

    if mask_only:
        mh, mp = (o.reshape(B, C, F, T) for o in outs)
        return (None, None, mh, mp)
    oh, op, mh, mp = (o.reshape(B, C, F, T) for o in outs)
    return (oh, op, mh, mp)


class HPSS:
    """Thin wrapper mirroring the PyTorch nn.Module interface."""

    def __init__(self, kernel_size=31, power=2.0, hard=False, mask_only=False):
        self.kernel_size = kernel_size
        self.power = power
        self.hard = hard
        self.mask_only = mask_only

    def __call__(self, mag_specgrams):
        return hpss_pallas(mag_specgrams, self.kernel_size, self.power,
                           self.hard, self.mask_only)


# ----------------------------------------------------------------------------
# Pure-numpy reference (odd kernel sizes; mirrors the torch `hpss` semantics)
# ----------------------------------------------------------------------------
def _ref_hpss_numpy(x, k, power=2.0, eps=1e-6):
    B, C, F, T = x.shape
    off = k // 2
    xpf = np.pad(x, ((0, 0), (0, 0), (off, off), (0, 0)), mode="reflect")
    xpt = np.pad(x, ((0, 0), (0, 0), (0, 0), (off, off)), mode="reflect")
    perc = np.empty_like(x)
    harm = np.empty_like(x)
    for f in range(F):
        perc[:, :, f, :] = np.median(xpf[:, :, f:f + k, :], axis=2)
    for t in range(T):
        harm[:, :, :, t] = np.median(xpt[:, :, :, t:t + k], axis=3)
    perc = perc ** power
    harm = harm ** power
    mh = (harm + eps) / (harm + perc + eps)
    mp = (perc + eps) / (harm + perc + eps)
    return x * mh, x * mp, mh, mp


if __name__ == "__main__":
    kernel_size = 31                     # module default
    module = HPSS(kernel_size=kernel_size, power=2.0, hard=False, mask_only=False)

    # --- small primary test (single tile) ---
    key = jax.random.PRNGKey(0)
    B, C, F, T = 2, 4, 16, 16            # reflect pad (15) < 16
    mag = jnp.abs(jax.random.normal(key, (B, C, F, T), dtype=jnp.float32)) + 0.1

    oh, op, mh, mp = jax.block_until_ready(jax.jit(module.__call__)(mag))
    ref = _ref_hpss_numpy(np.asarray(mag), kernel_size, power=2.0)
    for got, want in zip((oh, op, mh, mp), ref):
        np.testing.assert_allclose(np.asarray(got), want, rtol=5e-4, atol=5e-4)

    # --- mask_only path: dedicated 2-output kernel ---
    module_m = HPSS(kernel_size=kernel_size, power=2.0, hard=False, mask_only=True)
    _, _, mh2, mp2 = jax.block_until_ready(jax.jit(module_m.__call__)(mag))
    np.testing.assert_allclose(np.asarray(mh2), ref[2], rtol=5e-4, atol=5e-4)
    np.testing.assert_allclose(np.asarray(mp2), ref[3], rtol=5e-4, atol=5e-4)

    # --- multi-freq-tile config with partial edge blocks in freq and time ---
    B2, C2, F2, T2 = 1, 2, 264, 200
    mag2 = jnp.abs(jax.random.normal(jax.random.PRNGKey(1),
                                     (B2, C2, F2, T2), dtype=jnp.float32)) + 0.1
    outs2 = jax.block_until_ready(jax.jit(module.__call__)(mag2))
    ref2 = _ref_hpss_numpy(np.asarray(mag2), kernel_size, power=2.0)
    for got, want in zip(outs2, ref2):
        np.testing.assert_allclose(np.asarray(got), want, rtol=5e-4, atol=5e-4)

    print("KERNEL_OK")
</pallas_src>

<mosaic_0001>
module attributes {stable_mosaic.version = 11 : i64} {
  func.func @kernel(%arg0: i32, %arg1: i32, %arg2: i32, %arg3: memref<8x48x256xf32, #tpu.memory_space<any>>, %arg4: memref<1x16x128xf32, #tpu.memory_space<vmem>>, %arg5: memref<1x16x128xf32, #tpu.memory_space<vmem>>, %arg6: memref<1x16x128xf32, #tpu.memory_space<vmem>>, %arg7: memref<1x16x128xf32, #tpu.memory_space<vmem>>, %arg8: memref<48x256xf32, #tpu.memory_space<vmem>>, %arg9: memref<1x!tpu.dma_semaphore, #tpu.memory_space<semaphore_mem>>) attributes {dimension_semantics = [#tpu.dimension_semantics<parallel>, #tpu.dimension_semantics<parallel>, #tpu.dimension_semantics<parallel>], iteration_bounds = array<i64: 8, 1, 1>, scalar_prefetch = 0 : i64, scratch_operands = 2 : i64, tpu.core_type = #tpu.core_type<tc>, window_params = [{}, {transform_indices = @transform_1, window_bounds = array<i64: 1, 16, 128>}, {transform_indices = @transform_2, window_bounds = array<i64: 1, 16, 128>}, {transform_indices = @transform_3, window_bounds = array<i64: 1, 16, 128>}, {transform_indices = @transform_4, window_bounds = array<i64: 1, 16, 128>}]} {
    %c16_i32 = arith.constant 16 : i32
    %0 = arith.muli %arg1, %c16_i32 : i32
    %1 = tpu.assume_multiple %0, 8 : i32
    %c128_i32 = arith.constant 128 : i32
    %2 = arith.muli %arg2, %c128_i32 : i32
    %3 = tpu.assume_multiple %2, 128 : i32
    %c0_i32 = arith.constant 0 : i32
    %4 = tpu.memref_slice %arg3[%arg0, %1, %3] : memref<8x48x256xf32, #tpu.memory_space<any>> -> memref<1x48x256xf32, #tpu.memory_space<any>>
    %5 = tpu.memref_squeeze %4 : memref<1x48x256xf32, #tpu.memory_space<any>> -> memref<48x256xf32, #tpu.memory_space<any>>
    %6 = tpu.memref_slice %arg9[%c0_i32] : memref<1x!tpu.dma_semaphore, #tpu.memory_space<semaphore_mem>> -> memref<1x!tpu.dma_semaphore, #tpu.memory_space<semaphore_mem>>
    %7 = tpu.memref_squeeze %6 : memref<1x!tpu.dma_semaphore, #tpu.memory_space<semaphore_mem>> -> memref<!tpu.dma_semaphore, #tpu.memory_space<semaphore_mem>>
    tpu.enqueue_dma source(%5 : memref<48x256xf32, #tpu.memory_space<any>>) target(%arg8 : memref<48x256xf32, #tpu.memory_space<vmem>>) target_semaphore(%7 : memref<!tpu.dma_semaphore, #tpu.memory_space<semaphore_mem>>)
    %c0_i32_0 = arith.constant 0 : i32
    %8 = tpu.memref_slice %arg3[%arg0, %1, %3] : memref<8x48x256xf32, #tpu.memory_space<any>> -> memref<1x48x256xf32, #tpu.memory_space<any>>
    %9 = tpu.memref_squeeze %8 : memref<1x48x256xf32, #tpu.memory_space<any>> -> memref<48x256xf32, #tpu.memory_space<any>>
    %10 = tpu.memref_slice %arg9[%c0_i32_0] : memref<1x!tpu.dma_semaphore, #tpu.memory_space<semaphore_mem>> -> memref<1x!tpu.dma_semaphore, #tpu.memory_space<semaphore_mem>>
    %11 = tpu.memref_squeeze %10 : memref<1x!tpu.dma_semaphore, #tpu.memory_space<semaphore_mem>> -> memref<!tpu.dma_semaphore, #tpu.memory_space<semaphore_mem>>
    tpu.wait_dma2 semaphore(%11 : memref<!tpu.dma_semaphore, #tpu.memory_space<semaphore_mem>>) src(%9 : memref<48x256xf32, #tpu.memory_space<any>>) dst(%arg8 : memref<48x256xf32, #tpu.memory_space<vmem>>)
    %c0_i32_1 = arith.constant 0 : i32
    %c2_i32 = arith.constant 2 : i32
    %12 = arith.addi %c0_i32_1, %c2_i32 : i32
    %c1_i32 = arith.constant 1 : i32
    scf.for %arg10 = %c0_i32_1 to %12 step %c1_i32  : i32 {
      %c8_i32 = arith.constant 8 : i32
      %13 = arith.muli %arg10, %c8_i32 : i32
      %14 = tpu.assume_multiple %13, 8 : i32
      %15 = arith.index_cast %14 : i32 to index
      %c0 = arith.constant 0 : index
      %16 = vector.load %arg8[%15, %c0] : memref<48x256xf32, #tpu.memory_space<vmem>>, vector<40x256xf32>
      %17 = vector.extract_strided_slice %16 {offsets = [0, 15], sizes = [8, 128], strides = [1, 1]} : vector<40x256xf32> to vector<8x128xf32>
      %18 = vector.extract_strided_slice %16 {offsets = [1, 15], sizes = [8, 128], strides = [1, 1]} : vector<40x256xf32> to vector<8x128xf32>
      %19 = vector.extract_strided_slice %16 {offsets = [2, 15], sizes = [8, 128], strides = [1, 1]} : vector<40x256xf32> to vector<8x128xf32>
      %20 = vector.extract_strided_slice %16 {offsets = [3, 15], sizes = [8, 128], strides = [1, 1]} : vector<40x256xf32> to vector<8x128xf32>
      %21 = vector.extract_strided_slice %16 {offsets = [4, 15], sizes = [8, 128], strides = [1, 1]} : vector<40x256xf32> to vector<8x128xf32>
      %22 = vector.extract_strided_slice %16 {offsets = [5, 15], sizes = [8, 128], strides = [1, 1]} : vector<40x256xf32> to vector<8x128xf32>
      %23 = vector.extract_strided_slice %16 {offsets = [6, 15], sizes = [8, 128], strides = [1, 1]} : vector<40x256xf32> to vector<8x128xf32>
      %24 = vector.extract_strided_slice %16 {offsets = [7, 15], sizes = [8, 128], strides = [1, 1]} : vector<40x256xf32> to vector<8x128xf32>
      %25 = vector.extract_strided_slice %16 {offsets = [8, 15], sizes = [8, 128], strides = [1, 1]} : vector<40x256xf32> to vector<8x128xf32>
      %26 = vector.extract_strided_slice %16 {offsets = [9, 15], sizes = [8, 128], strides = [1, 1]} : vector<40x256xf32> to vector<8x128xf32>
      %27 = vector.extract_strided_slice %16 {offsets = [10, 15], sizes = [8, 128], strides = [1, 1]} : vector<40x256xf32> to vector<8x128xf32>
      %28 = vector.extract_strided_slice %16 {offsets = [11, 15], sizes = [8, 128], strides = [1, 1]} : vector<40x256xf32> to vector<8x128xf32>
      %29 = vector.extract_strided_slice %16 {offsets = [12, 15], sizes = [8, 128], strides = [1, 1]} : vector<40x256xf32> to vector<8x128xf32>
      %30 = vector.extract_strided_slice %16 {offsets = [13, 15], sizes = [8, 128], strides = [1, 1]} : vector<40x256xf32> to vector<8x128xf32>
      %31 = vector.extract_strided_slice %16 {offsets = [14, 15], sizes = [8, 128], strides = [1, 1]} : vector<40x256xf32> to vector<8x128xf32>
      %32 = vector.extract_strided_slice %16 {offsets = [15, 15], sizes = [8, 128], strides = [1, 1]} : vector<40x256xf32> to vector<8x128xf32>
      %33 = vector.extract_strided_slice %16 {offsets = [16, 15], sizes = [8, 128], strides = [1, 1]} : vector<40x256xf32> to vector<8x128xf32>
      %34 = vector.extract_strided_slice %16 {offsets = [17, 15], sizes = [8, 128], strides = [1, 1]} : vector<40x256xf32> to vector<8x128xf32>
      %35 = vector.extract_strided_slice %16 {offsets = [18, 15], sizes = [8, 128], strides = [1, 1]} : vector<40x256xf32> to vector<8x128xf32>
      %36 = vector.extract_strided_slice %16 {offsets = [19, 15], sizes = [8, 128], strides = [1, 1]} : vector<40x256xf32> to vector<8x128xf32>
      %37 = vector.extract_strided_slice %16 {offsets = [20, 15], sizes = [8, 128], strides = [1, 1]} : vector<40x256xf32> to vector<8x128xf32>
      %38 = vector.extract_strided_slice %16 {offsets = [21, 15], sizes = [8, 128], strides = [1, 1]} : vector<40x256xf32> to vector<8x128xf32>
      %39 = vector.extract_strided_slice %16 {offsets = [22, 15], sizes = [8, 128], strides = [1, 1]} : vector<40x256xf32> to vector<8x128xf32>
      %40 = vector.extract_strided_slice %16 {offsets = [23, 15], sizes = [8, 128], strides = [1, 1]} : vector<40x256xf32> to vector<8x128xf32>
      %41 = vector.extract_strided_slice %16 {offsets = [24, 15], sizes = [8, 128], strides = [1, 1]} : vector<40x256xf32> to vector<8x128xf32>
      %42 = vector.extract_strided_slice %16 {offsets = [25, 15], sizes = [8, 128], strides = [1, 1]} : vector<40x256xf32> to vector<8x128xf32>
      %43 = vector.extract_strided_slice %16 {offsets = [26, 15], sizes = [8, 128], strides = [1, 1]} : vector<40x256xf32> to vector<8x128xf32>
      %44 = vector.extract_strided_slice %16 {offsets = [27, 15], sizes = [8, 128], strides = [1, 1]} : vector<40x256xf32> to vector<8x128xf32>
      %45 = vector.extract_strided_slice %16 {offsets = [28, 15], sizes = [8, 128], strides = [1, 1]} : vector<40x256xf32> to vector<8x128xf32>
      %46 = vector.extract_strided_slice %16 {offsets = [29, 15], sizes = [8, 128], strides = [1, 1]} : vector<40x256xf32> to vector<8x128xf32>
      %47 = vector.extract_strided_slice %16 {offsets = [30, 15], sizes = [8, 128], strides = [1, 1]} : vector<40x256xf32> to vector<8x128xf32>
      %48 = arith.minimumf %17, %18 : vector<8x128xf32>
      %49 = arith.maximumf %17, %18 : vector<8x128xf32>
      %50 = arith.minimumf %19, %20 : vector<8x128xf32>
      %51 = arith.maximumf %19, %20 : vector<8x128xf32>
      %52 = arith.minimumf %48, %50 : vector<8x128xf32>
      %53 = arith.maximumf %48, %50 : vector<8x128xf32>
      %54 = arith.minimumf %49, %51 : vector<8x128xf32>
      %55 = arith.maximumf %49, %51 : vector<8x128xf32>
      %56 = arith.minimumf %54, %53 : vector<8x128xf32>
      %57 = arith.maximumf %54, %53 : vector<8x128xf32>
      %58 = arith.minimumf %21, %22 : vector<8x128xf32>
      %59 = arith.maximumf %21, %22 : vector<8x128xf32>
      %60 = arith.minimumf %23, %24 : vector<8x128xf32>
      %61 = arith.maximumf %23, %24 : vector<8x128xf32>
      %62 = arith.minimumf %58, %60 : vector<8x128xf32>
      %63 = arith.maximumf %58, %60 : vector<8x128xf32>
      %64 = arith.minimumf %59, %61 : vector<8x128xf32>
      %65 = arith.maximumf %59, %61 : vector<8x128xf32>
      %66 = arith.minimumf %64, %63 : vector<8x128xf32>
      %67 = arith.maximumf %64, %63 : vector<8x128xf32>
      %68 = arith.minimumf %52, %62 : vector<8x128xf32>
      %69 = arith.maximumf %52, %62 : vector<8x128xf32>
      %70 = arith.minimumf %57, %67 : vector<8x128xf32>
      %71 = arith.maximumf %57, %67 : vector<8x128xf32>
      %72 = arith.minimumf %70, %69 : vector<8x128xf32>
      %73 = arith.maximumf %70, %69 : vector<8x128xf32>
      %74 = arith.minimumf %56, %66 : vector<8x128xf32>
      %75 = arith.maximumf %56, %66 : vector<8x128xf32>
      %76 = arith.minimumf %55, %65 : vector<8x128xf32>
      %77 = arith.maximumf %55, %65 : vector<8x128xf32>
      %78 = arith.minimumf %76, %75 : vector<8x128xf32>
      %79 = arith.maximumf %76, %75 : vector<8x128xf32>
      %80 = arith.minimumf %74, %72 : vector<8x128xf32>
      %81 = arith.maximumf %74, %72 : vector<8x128xf32>
      %82 = arith.minimumf %78, %73 : vector<8x128xf32>
      %83 = arith.maximumf %78, %73 : vector<8x128xf32>
      %84 = arith.minimumf %79, %71 : vector<8x128xf32>
      %85 = arith.maximumf %79, %71 : vector<8x128xf32>
      %86 = arith.minimumf %25, %26 : vector<8x128xf32>
      %87 = arith.maximumf %25, %26 : vector<8x128xf32>
      %88 = arith.minimumf %27, %28 : vector<8x128xf32>
      %89 = arith.maximumf %27, %28 : vector<8x128xf32>
      %90 = arith.minimumf %86, %88 : vector<8x128xf32>
      %91 = arith.maximumf %86, %88 : vector<8x128xf32>
      %92 = arith.minimumf %87, %89 : vector<8x128xf32>
      %93 = arith.maximumf %87, %89 : vector<8x128xf32>
      %94 = arith.minimumf %92, %91 : vector<8x128xf32>
      %95 = arith.maximumf %92, %91 : vector<8x128xf32>
      %96 = arith.minimumf %29, %30 : vector<8x128xf32>
      %97 = arith.maximumf %29, %30 : vector<8x128xf32>
      %98 = arith.minimumf %31, %32 : vector<8x128xf32>
      %99 = arith.maximumf %31, %32 : vector<8x128xf32>
      %100 = arith.minimumf %96, %98 : vector<8x128xf32>
      %101 = arith.maximumf %96, %98 : vector<8x128xf32>
      %102 = arith.minimumf %97, %99 : vector<8x128xf32>
      %103 = arith.maximumf %97, %99 : vector<8x128xf32>
      %104 = arith.minimumf %102, %101 : vector<8x128xf32>
      %105 = arith.maximumf %102, %101 : vector<8x128xf32>
      %106 = arith.minimumf %90, %100 : vector<8x128xf32>
      %107 = arith.maximumf %90, %100 : vector<8x128xf32>
      %108 = arith.minimumf %95, %105 : vector<8x128xf32>
      %109 = arith.maximumf %95, %105 : vector<8x128xf32>
      %110 = arith.minimumf %108, %107 : vector<8x128xf32>
      %111 = arith.maximumf %108, %107 : vector<8x128xf32>
      %112 = arith.minimumf %94, %104 : vector<8x128xf32>
      %113 = arith.maximumf %94, %104 : vector<8x128xf32>
      %114 = arith.minimumf %93, %103 : vector<8x128xf32>
      %115 = arith.maximumf %93, %103 : vector<8x128xf32>
      %116 = arith.minimumf %114, %113 : vector<8x128xf32>
      %117 = arith.maximumf %114, %113 : vector<8x128xf32>
      %118 = arith.minimumf %112, %110 : vector<8x128xf32>
      %119 = arith.maximumf %112, %110 : vector<8x128xf32>
      %120 = arith.minimumf %116, %111 : vector<8x128xf32>
      %121 = arith.maximumf %116, %111 : vector<8x128xf32>
      %122 = arith.minimumf %117, %109 : vector<8x128xf32>
      %123 = arith.maximumf %117, %109 : vector<8x128xf32>
      %124 = arith.minimumf %68, %106 : vector<8x128xf32>
      %125 = arith.maximumf %68, %106 : vector<8x128xf32>
      %126 = arith.minimumf %83, %121 : vector<8x128xf32>
      %127 = arith.maximumf %83, %121 : vector<8x128xf32>
      %128 = arith.minimumf %126, %125 : vector<8x128xf32>
      %129 = arith.maximumf %126, %125 : vector<8x128xf32>
      %130 = arith.minimumf %81, %119 : vector<8x128xf32>
      %131 = arith.maximumf %81, %119 : vector<8x128xf32>
      %132 = arith.minimumf %85, %123 : vector<8x128xf32>
      %133 = arith.maximumf %85, %123 : vector<8x128xf32>
      %134 = arith.minimumf %132, %131 : vector<8x128xf32>
      %135 = arith.maximumf %132, %131 : vector<8x128xf32>
      %136 = arith.minimumf %130, %128 : vector<8x128xf32>
      %137 = arith.maximumf %130, %128 : vector<8x128xf32>
      %138 = arith.minimumf %134, %129 : vector<8x128xf32>
      %139 = arith.maximumf %134, %129 : vector<8x128xf32>
      %140 = arith.minimumf %135, %127 : vector<8x128xf32>
      %141 = arith.maximumf %135, %127 : vector<8x128xf32>
      %142 = arith.minimumf %80, %118 : vector<8x128xf32>
      %143 = arith.maximumf %80, %118 : vector<8x128xf32>
      %144 = arith.minimumf %84, %122 : vector<8x128xf32>
      %145 = arith.maximumf %84, %122 : vector<8x128xf32>
      %146 = arith.minimumf %144, %143 : vector<8x128xf32>
      %147 = arith.maximumf %144, %143 : vector<8x128xf32>
      %148 = arith.minimumf %82, %120 : vector<8x128xf32>
      %149 = arith.maximumf %82, %120 : vector<8x128xf32>
      %150 = arith.minimumf %77, %115 : vector<8x128xf32>
      %151 = arith.maximumf %77, %115 : vector<8x128xf32>
      %152 = arith.minimumf %150, %149 : vector<8x128xf32>
      %153 = arith.maximumf %150, %149 : vector<8x128xf32>
      %154 = arith.minimumf %148, %146 : vector<8x128xf32>
      %155 = arith.maximumf %148, %146 : vector<8x128xf32>
      %156 = arith.minimumf %152, %147 : vector<8x128xf32>
      %157 = arith.maximumf %152, %147 : vector<8x128xf32>
      %158 = arith.minimumf %153, %145 : vector<8x128xf32>
      %159 = arith.maximumf %153, %145 : vector<8x128xf32>
      %160 = arith.minimumf %142, %136 : vector<8x128xf32>
      %161 = arith.maximumf %142, %136 : vector<8x128xf32>
      %162 = arith.minimumf %154, %137 : vector<8x128xf32>
      %163 = arith.maximumf %154, %137 : vector<8x128xf32>
      %164 = arith.minimumf %155, %138 : vector<8x128xf32>
      %165 = arith.maximumf %155, %138 : vector<8x128xf32>
      %166 = arith.minimumf %156, %139 : vector<8x128xf32>
      %167 = arith.maximumf %156, %139 : vector<8x128xf32>
      %168 = arith.minimumf %157, %140 : vector<8x128xf32>
      %169 = arith.maximumf %157, %140 : vector<8x128xf32>
      %170 = arith.minimumf %158, %141 : vector<8x128xf32>
      %171 = arith.maximumf %158, %141 : vector<8x128xf32>
      %172 = arith.minimumf %159, %133 : vector<8x128xf32>
      %173 = arith.maximumf %159, %133 : vector<8x128xf32>
      %174 = arith.minimumf %33, %34 : vector<8x128xf32>
      %175 = arith.maximumf %33, %34 : vector<8x128xf32>
      %176 = arith.minimumf %35, %36 : vector<8x128xf32>
      %177 = arith.maximumf %35, %36 : vector<8x128xf32>
      %178 = arith.minimumf %174, %176 : vector<8x128xf32>
      %179 = arith.maximumf %174, %176 : vector<8x128xf32>
      %180 = arith.minimumf %175, %177 : vector<8x128xf32>
      %181 = arith.maximumf %175, %177 : vector<8x128xf32>
      %182 = arith.minimumf %180, %179 : vector<8x128xf32>
      %183 = arith.maximumf %180, %179 : vector<8x128xf32>
      %184 = arith.minimumf %37, %38 : vector<8x128xf32>
      %185 = arith.maximumf %37, %38 : vector<8x128xf32>
      %186 = arith.minimumf %39, %40 : vector<8x128xf32>
      %187 = arith.maximumf %39, %40 : vector<8x128xf32>
      %188 = arith.minimumf %184, %186 : vector<8x128xf32>
      %189 = arith.maximumf %184, %186 : vector<8x128xf32>
      %190 = arith.minimumf %185, %187 : vector<8x128xf32>
      %191 = arith.maximumf %185, %187 : vector<8x128xf32>
      %192 = arith.minimumf %190, %189 : vector<8x128xf32>
      %193 = arith.maximumf %190, %189 : vector<8x128xf32>
      %194 = arith.minimumf %178, %188 : vector<8x128xf32>
      %195 = arith.maximumf %178, %188 : vector<8x128xf32>
      %196 = arith.minimumf %183, %193 : vector<8x128xf32>
      %197 = arith.maximumf %183, %193 : vector<8x128xf32>
      %198 = arith.minimumf %196, %195 : vector<8x128xf32>
      %199 = arith.maximumf %196, %195 : vector<8x128xf32>
      %200 = arith.minimumf %182, %192 : vector<8x128xf32>
      %201 = arith.maximumf %182, %192 : vector<8x128xf32>
      %202 = arith.minimumf %181, %191 : vector<8x128xf32>
      %203 = arith.maximumf %181, %191 : vector<8x128xf32>
      %204 = arith.minimumf %202, %201 : vector<8x128xf32>
      %205 = arith.maximumf %202, %201 : vector<8x128xf32>
      %206 = arith.minimumf %200, %198 : vector<8x128xf32>
      %207 = arith.maximumf %200, %198 : vector<8x128xf32>
      %208 = arith.minimumf %204, %199 : vector<8x128xf32>
      %209 = arith.maximumf %204, %199 : vector<8x128xf32>
      %210 = arith.minimumf %205, %197 : vector<8x128xf32>
      %211 = arith.maximumf %205, %197 : vector<8x128xf32>
      %212 = arith.minimumf %41, %42 : vector<8x128xf32>
      %213 = arith.maximumf %41, %42 : vector<8x128xf32>
      %214 = arith.minimumf %43, %44 : vector<8x128xf32>
      %215 = arith.maximumf %43, %44 : vector<8x128xf32>
      %216 = arith.minimumf %212, %214 : vector<8x128xf32>
      %217 = arith.maximumf %212, %214 : vector<8x128xf32>
      %218 = arith.minimumf %213, %215 : vector<8x128xf32>
      %219 = arith.maximumf %213, %215 : vector<8x128xf32>
      %220 = arith.minimumf %218, %217 : vector<8x128xf32>
      %221 = arith.maximumf %218, %217 : vector<8x128xf32>
      %222 = arith.minimumf %45, %46 : vector<8x128xf32>
      %223 = arith.maximumf %45, %46 : vector<8x128xf32>
      %224 = arith.minimumf %222, %47 : vector<8x128xf32>
      %225 = arith.maximumf %222, %47 : vector<8x128xf32>
      %226 = arith.minimumf %223, %225 : vector<8x128xf32>
      %227 = arith.maximumf %223, %225 : vector<8x128xf32>
      %228 = arith.minimumf %216, %224 : vector<8x128xf32>
      %229 = arith.maximumf %216, %224 : vector<8x128xf32>
      %230 = arith.minimumf %221, %227 : vector<8x128xf32>
      %231 = arith.maximumf %221, %227 : vector<8x128xf32>
      %232 = arith.minimumf %230, %229 : vector<8x128xf32>
      %233 = arith.maximumf %230, %229 : vector<8x128xf32>
      %234 = arith.minimumf %220, %226 : vector<8x128xf32>
      %235 = arith.maximumf %220, %226 : vector<8x128xf32>
      %236 = arith.minimumf %219, %235 : vector<8x128xf32>
      %237 = arith.maximumf %219, %235 : vector<8x128xf32>
      %238 = arith.minimumf %234, %232 : vector<8x128xf32>
      %239 = arith.maximumf %234, %232 : vector<8x128xf32>
      %240 = arith.minimumf %236, %233 : vector<8x128xf32>
      %241 = arith.maximumf %236, %233 : vector<8x128xf32>
      %242 = arith.minimumf %237, %231 : vector<8x128xf32>
      %243 = arith.maximumf %237, %231 : vector<8x128xf32>
      %244 = arith.minimumf %194, %228 : vector<8x128xf32>
      %245 = arith.maximumf %194, %228 : vector<8x128xf32>
      %246 = arith.minimumf %209, %241 : vector<8x128xf32>
      %247 = arith.maximumf %209, %241 : vector<8x128xf32>
      %248 = arith.minimumf %246, %245 : vector<8x128xf32>
      %249 = arith.maximumf %246, %245 : vector<8x128xf32>
      %250 = arith.minimumf %207, %239 : vector<8x128xf32>
      %251 = arith.maximumf %207, %239 : vector<8x128xf32>
      %252 = arith.minimumf %211, %243 : vector<8x128xf32>
      %253 = arith.maximumf %211, %243 : vector<8x128xf32>
      %254 = arith.minimumf %252, %251 : vector<8x128xf32>
      %255 = arith.maximumf %252, %251 : vector<8x128xf32>
      %256 = arith.minimumf %250, %248 : vector<8x128xf32>
      %257 = arith.maximumf %250, %248 : vector<8x128xf32>
      %258 = arith.minimumf %254, %249 : vector<8x128xf32>
      %259 = arith.maximumf %254, %249 : vector<8x128xf32>
      %260 = arith.minimumf %255, %247 : vector<8x128xf32>
      %261 = arith.maximumf %255, %247 : vector<8x128xf32>
      %262 = arith.minimumf %206, %238 : vector<8x128xf32>
      %263 = arith.maximumf %206, %238 : vector<8x128xf32>
      %264 = arith.minimumf %210, %242 : vector<8x128xf32>
      %265 = arith.maximumf %210, %242 : vector<8x128xf32>
      %266 = arith.minimumf %264, %263 : vector<8x128xf32>
      %267 = arith.maximumf %264, %263 : vector<8x128xf32>
      %268 = arith.minimumf %208, %240 : vector<8x128xf32>
      %269 = arith.maximumf %208, %240 : vector<8x128xf32>
      %270 = arith.minimumf %203, %269 : vector<8x128xf32>
      %271 = arith.maximumf %203, %269 : vector<8x128xf32>
      %272 = arith.minimumf %268, %266 : vector<8x128xf32>
      %273 = arith.maximumf %268, %266 : vector<8x128xf32>
      %274 = arith.minimumf %270, %267 : vector<8x128xf32>
      %275 = arith.maximumf %270, %267 : vector<8x128xf32>
      %276 = arith.minimumf %271, %265 : vector<8x128xf32>
      %277 = arith.maximumf %271, %265 : vector<8x128xf32>
      %278 = arith.minimumf %262, %256 : vector<8x128xf32>
      %279 = arith.maximumf %262, %256 : vector<8x128xf32>
      %280 = arith.minimumf %272, %257 : vector<8x128xf32>
      %281 = arith.maximumf %272, %257 : vector<8x128xf32>
      %282 = arith.minimumf %273, %258 : vector<8x128xf32>
      %283 = arith.maximumf %273, %258 : vector<8x128xf32>
      %284 = arith.minimumf %274, %259 : vector<8x128xf32>
      %285 = arith.maximumf %274, %259 : vector<8x128xf32>
      %286 = arith.minimumf %275, %260 : vector<8x128xf32>
      %287 = arith.maximumf %275, %260 : vector<8x128xf32>
      %288 = arith.minimumf %276, %261 : vector<8x128xf32>
      %289 = arith.maximumf %276, %261 : vector<8x128xf32>
      %290 = arith.minimumf %277, %253 : vector<8x128xf32>
      %291 = arith.maximumf %277, %253 : vector<8x128xf32>
      %292 = arith.maximumf %124, %244 : vector<8x128xf32>
      %293 = arith.minimumf %167, %285 : vector<8x128xf32>
      %294 = arith.maximumf %293, %292 : vector<8x128xf32>
      %295 = arith.maximumf %163, %281 : vector<8x128xf32>
      %296 = arith.minimumf %171, %289 : vector<8x128xf32>
      %297 = arith.minimumf %296, %295 : vector<8x128xf32>
      %298 = arith.maximumf %297, %294 : vector<8x128xf32>
      %299 = arith.maximumf %161, %279 : vector<8x128xf32>
      %300 = arith.minimumf %169, %287 : vector<8x128xf32>
      %301 = arith.maximumf %300, %299 : vector<8x128xf32>
      %302 = arith.maximumf %165, %283 : vector<8x128xf32>
      %303 = arith.minimumf %173, %291 : vector<8x128xf32>
      %304 = arith.minimumf %303, %302 : vector<8x128xf32>
      %305 = arith.minimumf %304, %301 : vector<8x128xf32>
      %306 = arith.maximumf %305, %298 : vector<8x128xf32>
      %307 = arith.maximumf %160, %278 : vector<8x128xf32>
      %308 = arith.minimumf %168, %286 : vector<8x128xf32>
      %309 = arith.maximumf %308, %307 : vector<8x128xf32>
      %310 = arith.maximumf %164, %282 : vector<8x128xf32>
      %311 = arith.minimumf %172, %290 : vector<8x128xf32>
      %312 = arith.minimumf %311, %310 : vector<8x128xf32>
      %313 = arith.maximumf %312, %309 : vector<8x128xf32>
      %314 = arith.maximumf %162, %280 : vector<8x128xf32>
      %315 = arith.minimumf %170, %288 : vector<8x128xf32>
      %316 = arith.maximumf %315, %314 : vector<8x128xf32>
      %317 = arith.maximumf %166, %284 : vector<8x128xf32>
      %318 = arith.minimumf %151, %317 : vector<8x128xf32>
      %319 = arith.minimumf %318, %316 : vector<8x128xf32>
      %320 = arith.minimumf %319, %313 : vector<8x128xf32>
      %321 = arith.minimumf %320, %306 : vector<8x128xf32>
      %322 = vector.extract_strided_slice %16 {offsets = [15, 0], sizes = [8, 256], strides = [1, 1]} : vector<40x256xf32> to vector<8x256xf32>
      %323 = vector.extract_strided_slice %322 {offsets = [0, 0], sizes = [8, 128], strides = [1, 1]} : vector<8x256xf32> to vector<8x128xf32>
      %324 = vector.extract_strided_slice %322 {offsets = [0, 1], sizes = [8, 128], strides = [1, 1]} : vector<8x256xf32> to vector<8x128xf32>
      %325 = vector.extract_strided_slice %322 {offsets = [0, 2], sizes = [8, 128], strides = [1, 1]} : vector<8x256xf32> to vector<8x128xf32>
      %326 = vector.extract_strided_slice %322 {offsets = [0, 3], sizes = [8, 128], strides = [1, 1]} : vector<8x256xf32> to vector<8x128xf32>
      %327 = vector.extract_strided_slice %322 {offsets = [0, 4], sizes = [8, 128], strides = [1, 1]} : vector<8x256xf32> to vector<8x128xf32>
      %328 = vector.extract_strided_slice %322 {offsets = [0, 5], sizes = [8, 128], strides = [1, 1]} : vector<8x256xf32> to vector<8x128xf32>
      %329 = vector.extract_strided_slice %322 {offsets = [0, 6], sizes = [8, 128], strides = [1, 1]} : vector<8x256xf32> to vector<8x128xf32>
      %330 = vector.extract_strided_slice %322 {offsets = [0, 7], sizes = [8, 128], strides = [1, 1]} : vector<8x256xf32> to vector<8x128xf32>
      %331 = vector.extract_strided_slice %322 {offsets = [0, 8], sizes = [8, 128], strides = [1, 1]} : vector<8x256xf32> to vector<8x128xf32>
      %332 = vector.extract_strided_slice %322 {offsets = [0, 9], sizes = [8, 128], strides = [1, 1]} : vector<8x256xf32> to vector<8x128xf32>
      %333 = vector.extract_strided_slice %322 {offsets = [0, 10], sizes = [8, 128], strides = [1, 1]} : vector<8x256xf32> to vector<8x128xf32>
      %334 = vector.extract_strided_slice %322 {offsets = [0, 11], sizes = [8, 128], strides = [1, 1]} : vector<8x256xf32> to vector<8x128xf32>
      %335 = vector.extract_strided_slice %322 {offsets = [0, 12], sizes = [8, 128], strides = [1, 1]} : vector<8x256xf32> to vector<8x128xf32>
      %336 = vector.extract_strided_slice %322 {offsets = [0, 13], sizes = [8, 128], strides = [1, 1]} : vector<8x256xf32> to vector<8x128xf32>
      %337 = vector.extract_strided_slice %322 {offsets = [0, 14], sizes = [8, 128], strides = [1, 1]} : vector<8x256xf32> to vector<8x128xf32>
      %338 = vector.extract_strided_slice %322 {offsets = [0, 15], sizes = [8, 128], strides = [1, 1]} : vector<8x256xf32> to vector<8x128xf32>
      %339 = vector.extract_strided_slice %322 {offsets = [0, 16], sizes = [8, 128], strides = [1, 1]} : vector<8x256xf32> to vector<8x128xf32>
      %340 = vector.extract_strided_slice %322 {offsets = [0, 17], sizes = [8, 128], strides = [1, 1]} : vector<8x256xf32> to vector<8x128xf32>
      %341 = vector.extract_strided_slice %322 {offsets = [0, 18], sizes = [8, 128], strides = [1, 1]} : vector<8x256xf32> to vector<8x128xf32>
      %342 = vector.extract_strided_slice %322 {offsets = [0, 19], sizes = [8, 128], strides = [1, 1]} : vector<8x256xf32> to vector<8x128xf32>
      %343 = vector.extract_strided_slice %322 {offsets = [0, 20], sizes = [8, 128], strides = [1, 1]} : vector<8x256xf32> to vector<8x128xf32>
      %344 = vector.extract_strided_slice %322 {offsets = [0, 21], sizes = [8, 128], strides = [1, 1]} : vector<8x256xf32> to vector<8x128xf32>
      %345 = vector.extract_strided_slice %322 {offsets = [0, 22], sizes = [8, 128], strides = [1, 1]} : vector<8x256xf32> to vector<8x128xf32>
      %346 = vector.extract_strided_slice %322 {offsets = [0, 23], sizes = [8, 128], strides = [1, 1]} : vector<8x256xf32> to vector<8x128xf32>
      %347 = vector.extract_strided_slice %322 {offsets = [0, 24], sizes = [8, 128], strides = [1, 1]} : vector<8x256xf32> to vector<8x128xf32>
      %348 = vector.extract_strided_slice %322 {offsets = [0, 25], sizes = [8, 128], strides = [1, 1]} : vector<8x256xf32> to vector<8x128xf32>
      %349 = vector.extract_strided_slice %322 {offsets = [0, 26], sizes = [8, 128], strides = [1, 1]} : vector<8x256xf32> to vector<8x128xf32>
      %350 = vector.extract_strided_slice %322 {offsets = [0, 27], sizes = [8, 128], strides = [1, 1]} : vector<8x256xf32> to vector<8x128xf32>
      %351 = vector.extract_strided_slice %322 {offsets = [0, 28], sizes = [8, 128], strides = [1, 1]} : vector<8x256xf32> to vector<8x128xf32>
      %352 = vector.extract_strided_slice %322 {offsets = [0, 29], sizes = [8, 128], strides = [1, 1]} : vector<8x256xf32> to vector<8x128xf32>
      %353 = vector.extract_strided_slice %322 {offsets = [0, 30], sizes = [8, 128], strides = [1, 1]} : vector<8x256xf32> to vector<8x128xf32>
      %354 = arith.minimumf %323, %324 : vector<8x128xf32>
      %355 = arith.maximumf %323, %324 : vector<8x128xf32>
      %356 = arith.minimumf %325, %326 : vector<8x128xf32>
      %357 = arith.maximumf %325, %326 : vector<8x128xf32>
      %358 = arith.minimumf %354, %356 : vector<8x128xf32>
      %359 = arith.maximumf %354, %356 : vector<8x128xf32>
      %360 = arith.minimumf %355, %357 : vector<8x128xf32>
      %361 = arith.maximumf %355, %357 : vector<8x128xf32>
      %362 = arith.minimumf %360, %359 : vector<8x128xf32>
      %363 = arith.maximumf %360, %359 : vector<8x128xf32>
      %364 = arith.minimumf %327, %328 : vector<8x128xf32>
      %365 = arith.maximumf %327, %328 : vector<8x128xf32>
      %366 = arith.minimumf %329, %330 : vector<8x128xf32>
      %367 = arith.maximumf %329, %330 : vector<8x128xf32>
      %368 = arith.minimumf %364, %366 : vector<8x128xf32>
      %369 = arith.maximumf %364, %366 : vector<8x128xf32>
      %370 = arith.minimumf %365, %367 : vector<8x128xf32>
      %371 = arith.maximumf %365, %367 : vector<8x128xf32>
      %372 = arith.minimumf %370, %369 : vector<8x128xf32>
      %373 = arith.maximumf %370, %369 : vector<8x128xf32>
      %374 = arith.minimumf %358, %368 : vector<8x128xf32>
      %375 = arith.maximumf %358, %368 : vector<8x128xf32>
      %376 = arith.minimumf %363, %373 : vector<8x128xf32>
      %377 = arith.maximumf %363, %373 : vector<8x128xf32>
      %378 = arith.minimumf %376, %375 : vector<8x128xf32>
      %379 = arith.maximumf %376, %375 : vector<8x128xf32>
      %380 = arith.minimumf %362, %372 : vector<8x128xf32>
      %381 = arith.maximumf %362, %372 : vector<8x128xf32>
      %382 = arith.minimumf %361, %371 : vector<8x128xf32>
      %383 = arith.maximumf %361, %371 : vector<8x128xf32>
      %384 = arith.minimumf %382, %381 : vector<8x128xf32>
      %385 = arith.maximumf %382, %381 : vector<8x128xf32>
      %386 = arith.minimumf %380, %378 : vector<8x128xf32>
      %387 = arith.maximumf %380, %378 : vector<8x128xf32>
      %388 = arith.minimumf %384, %379 : vector<8x128xf32>
      %389 = arith.maximumf %384, %379 : vector<8x128xf32>
      %390 = arith.minimumf %385, %377 : vector<8x128xf32>
      %391 = arith.maximumf %385, %377 : vector<8x128xf32>
      %392 = arith.minimumf %331, %332 : vector<8x128xf32>
      %393 = arith.maximumf %331, %332 : vector<8x128xf32>
      %394 = arith.minimumf %333, %334 : vector<8x128xf32>
      %395 = arith.maximumf %333, %334 : vector<8x128xf32>
      %396 = arith.minimumf %392, %394 : vector<8x128xf32>
      %397 = arith.maximumf %392, %394 : vector<8x128xf32>
      %398 = arith.minimumf %393, %395 : vector<8x128xf32>
      %399 = arith.maximumf %393, %395 : vector<8x128xf32>
      %400 = arith.minimumf %398, %397 : vector<8x128xf32>
      %401 = arith.maximumf %398, %397 : vector<8x128xf32>
      %402 = arith.minimumf %335, %336 : vector<8x128xf32>
      %403 = arith.maximumf %335, %336 : vector<8x128xf32>
      %404 = arith.minimumf %337, %338 : vector<8x128xf32>
      %405 = arith.maximumf %337, %338 : vector<8x128xf32>
      %406 = arith.minimumf %402, %404 : vector<8x128xf32>
      %407 = arith.maximumf %402, %404 : vector<8x128xf32>
      %408 = arith.minimumf %403, %405 : vector<8x128xf32>
      %409 = arith.maximumf %403, %405 : vector<8x128xf32>
      %410 = arith.minimumf %408, %407 : vector<8x128xf32>
      %411 = arith.maximumf %408, %407 : vector<8x128xf32>
      %412 = arith.minimumf %396, %406 : vector<8x128xf32>
      %413 = arith.maximumf %396, %406 : vector<8x128xf32>
      %414 = arith.minimumf %401, %411 : vector<8x128xf32>
      %415 = arith.maximumf %401, %411 : vector<8x128xf32>
      %416 = arith.minimumf %414, %413 : vector<8x128xf32>
      %417 = arith.maximumf %414, %413 : vector<8x128xf32>
      %418 = arith.minimumf %400, %410 : vector<8x128xf32>
      %419 = arith.maximumf %400, %410 : vector<8x128xf32>
      %420 = arith.minimumf %399, %409 : vector<8x128xf32>
      %421 = arith.maximumf %399, %409 : vector<8x128xf32>
      %422 = arith.minimumf %420, %419 : vector<8x128xf32>
      %423 = arith.maximumf %420, %419 : vector<8x128xf32>
      %424 = arith.minimumf %418, %416 : vector<8x128xf32>
      %425 = arith.maximumf %418, %416 : vector<8x128xf32>
      %426 = arith.minimumf %422, %417 : vector<8x128xf32>
      %427 = arith.maximumf %422, %417 : vector<8x128xf32>
      %428 = arith.minimumf %423, %415 : vector<8x128xf32>
      %429 = arith.maximumf %423, %415 : vector<8x128xf32>
      %430 = arith.minimumf %374, %412 : vector<8x128xf32>
      %431 = arith.maximumf %374, %412 : vector<8x128xf32>
      %432 = arith.minimumf %389, %427 : vector<8x128xf32>
      %433 = arith.maximumf %389, %427 : vector<8x128xf32>
      %434 = arith.minimumf %432, %431 : vector<8x128xf32>
      %435 = arith.maximumf %432, %431 : vector<8x128xf32>
      %436 = arith.minimumf %387, %425 : vector<8x128xf32>
      %437 = arith.maximumf %387, %425 : vector<8x128xf32>
      %438 = arith.minimumf %391, %429 : vector<8x128xf32>
      %439 = arith.maximumf %391, %429 : vector<8x128xf32>
      %440 = arith.minimumf %438, %437 : vector<8x128xf32>
      %441 = arith.maximumf %438, %437 : vector<8x128xf32>
      %442 = arith.minimumf %436, %434 : vector<8x128xf32>
      %443 = arith.maximumf %436, %434 : vector<8x128xf32>
      %444 = arith.minimumf %440, %435 : vector<8x128xf32>
      %445 = arith.maximumf %440, %435 : vector<8x128xf32>
      %446 = arith.minimumf %441, %433 : vector<8x128xf32>
      %447 = arith.maximumf %441, %433 : vector<8x128xf32>
      %448 = arith.minimumf %386, %424 : vector<8x128xf32>
      %449 = arith.maximumf %386, %424 : vector<8x128xf32>
      %450 = arith.minimumf %390, %428 : vector<8x128xf32>
      %451 = arith.maximumf %390, %428 : vector<8x128xf32>
      %452 = arith.minimumf %450, %449 : vector<8x128xf32>
      %453 = arith.maximumf %450, %449 : vector<8x128xf32>
      %454 = arith.minimumf %388, %426 : vector<8x128xf32>
      %455 = arith.maximumf %388, %426 : vector<8x128xf32>
      %456 = arith.minimumf %383, %421 : vector<8x128xf32>
      %457 = arith.maximumf %383, %421 : vector<8x128xf32>
      %458 = arith.minimumf %456, %455 : vector<8x128xf32>
      %459 = arith.maximumf %456, %455 : vector<8x128xf32>
      %460 = arith.minimumf %454, %452 : vector<8x128xf32>
      %461 = arith.maximumf %454, %452 : vector<8x128xf32>
      %462 = arith.minimumf %458, %453 : vector<8x128xf32>
      %463 = arith.maximumf %458, %453 : vector<8x128xf32>
      %464 = arith.minimumf %459, %451 : vector<8x128xf32>
      %465 = arith.maximumf %459, %451 : vector<8x128xf32>
      %466 = arith.minimumf %448, %442 : vector<8x128xf32>
      %467 = arith.maximumf %448, %442 : vector<8x128xf32>
      %468 = arith.minimumf %460, %443 : vector<8x128xf32>
      %469 = arith.maximumf %460, %443 : vector<8x128xf32>
      %470 = arith.minimumf %461, %444 : vector<8x128xf32>
      %471 = arith.maximumf %461, %444 : vector<8x128xf32>
      %472 = arith.minimumf %462, %445 : vector<8x128xf32>
      %473 = arith.maximumf %462, %445 : vector<8x128xf32>
      %474 = arith.minimumf %463, %446 : vector<8x128xf32>
      %475 = arith.maximumf %463, %446 : vector<8x128xf32>
      %476 = arith.minimumf %464, %447 : vector<8x128xf32>
      %477 = arith.maximumf %464, %447 : vector<8x128xf32>
      %478 = arith.minimumf %465, %439 : vector<8x128xf32>
      %479 = arith.maximumf %465, %439 : vector<8x128xf32>
      %480 = arith.minimumf %339, %340 : vector<8x128xf32>
      %481 = arith.maximumf %339, %340 : vector<8x128xf32>
      %482 = arith.minimumf %341, %342 : vector<8x128xf32>
      %483 = arith.maximumf %341, %342 : vector<8x128xf32>
      %484 = arith.minimumf %480, %482 : vector<8x128xf32>
      %485 = arith.maximumf %480, %482 : vector<8x128xf32>
      %486 = arith.minimumf %481, %483 : vector<8x128xf32>
      %487 = arith.maximumf %481, %483 : vector<8x128xf32>
      %488 = arith.minimumf %486, %485 : vector<8x128xf32>
      %489 = arith.maximumf %486, %485 : vector<8x128xf32>
      %490 = arith.minimumf %343, %344 : vector<8x128xf32>
      %491 = arith.maximumf %343, %344 : vector<8x128xf32>
      %492 = arith.minimumf %345, %346 : vector<8x128xf32>
      %493 = arith.maximumf %345, %346 : vector<8x128xf32>
      %494 = arith.minimumf %490, %492 : vector<8x128xf32>
      %495 = arith.maximumf %490, %492 : vector<8x128xf32>
      %496 = arith.minimumf %491, %493 : vector<8x128xf32>
      %497 = arith.maximumf %491, %493 : vector<8x128xf32>
      %498 = arith.minimumf %496, %495 : vector<8x128xf32>
      %499 = arith.maximumf %496, %495 : vector<8x128xf32>
      %500 = arith.minimumf %484, %494 : vector<8x128xf32>
      %501 = arith.maximumf %484, %494 : vector<8x128xf32>
      %502 = arith.minimumf %489, %499 : vector<8x128xf32>
      %503 = arith.maximumf %489, %499 : vector<8x128xf32>
      %504 = arith.minimumf %502, %501 : vector<8x128xf32>
      %505 = arith.maximumf %502, %501 : vector<8x128xf32>
      %506 = arith.minimumf %488, %498 : vector<8x128xf32>
      %507 = arith.maximumf %488, %498 : vector<8x128xf32>
      %508 = arith.minimumf %487, %497 : vector<8x128xf32>
      %509 = arith.maximumf %487, %497 : vector<8x128xf32>
      %510 = arith.minimumf %508, %507 : vector<8x128xf32>
      %511 = arith.maximumf %508, %507 : vector<8x128xf32>
      %512 = arith.minimumf %506, %504 : vector<8x128xf32>
      %513 = arith.maximumf %506, %504 : vector<8x128xf32>
      %514 = arith.minimumf %510, %505 : vector<8x128xf32>
      %515 = arith.maximumf %510, %505 : vector<8x128xf32>
      %516 = arith.minimumf %511, %503 : vector<8x128xf32>
      %517 = arith.maximumf %511, %503 : vector<8x128xf32>
      %518 = arith.minimumf %347, %348 : vector<8x128xf32>
      %519 = arith.maximumf %347, %348 : vector<8x128xf32>
      %520 = arith.minimumf %349, %350 : vector<8x128xf32>
      %521 = arith.maximumf %349, %350 : vector<8x128xf32>
      %522 = arith.minimumf %518, %520 : vector<8x128xf32>
      %523 = arith.maximumf %518, %520 : vector<8x128xf32>
      %524 = arith.minimumf %519, %521 : vector<8x128xf32>
      %525 = arith.maximumf %519, %521 : vector<8x128xf32>
      %526 = arith.minimumf %524, %523 : vector<8x128xf32>
      %527 = arith.maximumf %524, %523 : vector<8x128xf32>
      %528 = arith.minimumf %351, %352 : vector<8x128xf32>
      %529 = arith.maximumf %351, %352 : vector<8x128xf32>
      %530 = arith.minimumf %528, %353 : vector<8x128xf32>
      %531 = arith.maximumf %528, %353 : vector<8x128xf32>
      %532 = arith.minimumf %529, %531 : vector<8x128xf32>
      %533 = arith.maximumf %529, %531 : vector<8x128xf32>
      %534 = arith.minimumf %522, %530 : vector<8x128xf32>
      %535 = arith.maximumf %522, %530 : vector<8x128xf32>
      %536 = arith.minimumf %527, %533 : vector<8x128xf32>
      %537 = arith.maximumf %527, %533 : vector<8x128xf32>
      %538 = arith.minimumf %536, %535 : vector<8x128xf32>
      %539 = arith.maximumf %536, %535 : vector<8x128xf32>
      %540 = arith.minimumf %526, %532 : vector<8x128xf32>
      %541 = arith.maximumf %526, %532 : vector<8x128xf32>
      %542 = arith.minimumf %525, %541 : vector<8x128xf32>
      %543 = arith.maximumf %525, %541 : vector<8x128xf32>
      %544 = arith.minimumf %540, %538 : vector<8x128xf32>
      %545 = arith.maximumf %540, %538 : vector<8x128xf32>
      %546 = arith.minimumf %542, %539 : vector<8x128xf32>
      %547 = arith.maximumf %542, %539 : vector<8x128xf32>
      %548 = arith.minimumf %543, %537 : vector<8x128xf32>
      %549 = arith.maximumf %543, %537 : vector<8x128xf32>
      %550 = arith.minimumf %500, %534 : vector<8x128xf32>
      %551 = arith.maximumf %500, %534 : vector<8x128xf32>
      %552 = arith.minimumf %515, %547 : vector<8x128xf32>
      %553 = arith.maximumf %515, %547 : vector<8x128xf32>
      %554 = arith.minimumf %552, %551 : vector<8x128xf32>
      %555 = arith.maximumf %552, %551 : vector<8x128xf32>
      %556 = arith.minimumf %513, %545 : vector<8x128xf32>
      %557 = arith.maximumf %513, %545 : vector<8x128xf32>
      %558 = arith.minimumf %517, %549 : vector<8x128xf32>
      %559 = arith.maximumf %517, %549 : vector<8x128xf32>
      %560 = arith.minimumf %558, %557 : vector<8x128xf32>
      %561 = arith.maximumf %558, %557 : vector<8x128xf32>
      %562 = arith.minimumf %556, %554 : vector<8x128xf32>
      %563 = arith.maximumf %556, %554 : vector<8x128xf32>
      %564 = arith.minimumf %560, %555 : vector<8x128xf32>
      %565 = arith.maximumf %560, %555 : vector<8x128xf32>
      %566 = arith.minimumf %561, %553 : vector<8x128xf32>
      %567 = arith.maximumf %561, %553 : vector<8x128xf32>
      %568 = arith.minimumf %512, %544 : vector<8x128xf32>
      %569 = arith.maximumf %512, %544 : vector<8x128xf32>
      %570 = arith.minimumf %516, %548 : vector<8x128xf32>
      %571 = arith.maximumf %516, %548 : vector<8x128xf32>
      %572 = arith.minimumf %570, %569 : vector<8x128xf32>
      %573 = arith.maximumf %570, %569 : vector<8x128xf32>
      %574 = arith.minimumf %514, %546 : vector<8x128xf32>
      %575 = arith.maximumf %514, %546 : vector<8x128xf32>
      %576 = arith.minimumf %509, %575 : vector<8x128xf32>
      %577 = arith.maximumf %509, %575 : vector<8x128xf32>
      %578 = arith.minimumf %574, %572 : vector<8x128xf32>
      %579 = arith.maximumf %574, %572 : vector<8x128xf32>
      %580 = arith.minimumf %576, %573 : vector<8x128xf32>
      %581 = arith.maximumf %576, %573 : vector<8x128xf32>
      %582 = arith.minimumf %577, %571 : vector<8x128xf32>
      %583 = arith.maximumf %577, %571 : vector<8x128xf32>
      %584 = arith.minimumf %568, %562 : vector<8x128xf32>
      %585 = arith.maximumf %568, %562 : vector<8x128xf32>
      %586 = arith.minimumf %578, %563 : vector<8x128xf32>
      %587 = arith.maximumf %578, %563 : vector<8x128xf32>
      %588 = arith.minimumf %579, %564 : vector<8x128xf32>
      %589 = arith.maximumf %579, %564 : vector<8x128xf32>
      %590 = arith.minimumf %580, %565 : vector<8x128xf32>
      %591 = arith.maximumf %580, %565 : vector<8x128xf32>
      %592 = arith.minimumf %581, %566 : vector<8x128xf32>
      %593 = arith.maximumf %581, %566 : vector<8x128xf32>
      %594 = arith.minimumf %582, %567 : vector<8x128xf32>
      %595 = arith.maximumf %582, %567 : vector<8x128xf32>
      %596 = arith.minimumf %583, %559 : vector<8x128xf32>
      %597 = arith.maximumf %583, %559 : vector<8x128xf32>
      %598 = arith.maximumf %430, %550 : vector<8x128xf32>
      %599 = arith.minimumf %473, %591 : vector<8x128xf32>
      %600 = arith.maximumf %599, %598 : vector<8x128xf32>
      %601 = arith.maximumf %469, %587 : vector<8x128xf32>
      %602 = arith.minimumf %477, %595 : vector<8x128xf32>
      %603 = arith.minimumf %602, %601 : vector<8x128xf32>
      %604 = arith.maximumf %603, %600 : vector<8x128xf32>
      %605 = arith.maximumf %467, %585 : vector<8x128xf32>
      %606 = arith.minimumf %475, %593 : vector<8x128xf32>
      %607 = arith.maximumf %606, %605 : vector<8x128xf32>
      %608 = arith.maximumf %471, %589 : vector<8x128xf32>
      %609 = arith.minimumf %479, %597 : vector<8x128xf32>
      %610 = arith.minimumf %609, %608 : vector<8x128xf32>
      %611 = arith.minimumf %610, %607 : vector<8x128xf32>
      %612 = arith.maximumf %611, %604 : vector<8x128xf32>
      %613 = arith.maximumf %466, %584 : vector<8x128xf32>
      %614 = arith.minimumf %474, %592 : vector<8x128xf32>
      %615 = arith.maximumf %614, %613 : vector<8x128xf32>
      %616 = arith.maximumf %470, %588 : vector<8x128xf32>
      %617 = arith.minimumf %478, %596 : vector<8x128xf32>
      %618 = arith.minimumf %617, %616 : vector<8x128xf32>
      %619 = arith.maximumf %618, %615 : vector<8x128xf32>
      %620 = arith.maximumf %468, %586 : vector<8x128xf32>
      %621 = arith.minimumf %476, %594 : vector<8x128xf32>
      %622 = arith.maximumf %621, %620 : vector<8x128xf32>
      %623 = arith.maximumf %472, %590 : vector<8x128xf32>
      %624 = arith.minimumf %457, %623 : vector<8x128xf32>
      %625 = arith.minimumf %624, %622 : vector<8x128xf32>
      %626 = arith.minimumf %625, %619 : vector<8x128xf32>
      %627 = arith.minimumf %626, %612 : vector<8x128xf32>
      %628 = arith.mulf %321, %321 : vector<8x128xf32>
      %629 = arith.mulf %627, %627 : vector<8x128xf32>
      %630 = arith.addf %629, %628 : vector<8x128xf32>
      %cst = arith.constant 9.99999997E-7 : f32
      %631 = vector.broadcast %cst : f32 to vector<8x128xf32>
      %632 = arith.addf %630, %631 : vector<8x128xf32>
      %633 = tpu.reciprocal %632 {approx = true} : vector<8x128xf32> -> vector<8x128xf32>
      %634 = arith.mulf %632, %633 : vector<8x128xf32>
      %cst_3 = arith.constant 2.000000e+00 : f32
      %635 = vector.broadcast %cst_3 : f32 to vector<8x128xf32>
      %636 = arith.subf %635, %634 : vector<8x128xf32>
      %637 = arith.mulf %633, %636 : vector<8x128xf32>
      %cst_4 = arith.constant 9.99999997E-7 : f32
      %638 = vector.broadcast %cst_4 : f32 to vector<8x128xf32>
      %639 = arith.addf %629, %638 : vector<8x128xf32>
      %640 = arith.mulf %639, %637 : vector<8x128xf32>
      %cst_5 = arith.constant 9.99999997E-7 : f32
      %641 = vector.broadcast %cst_5 : f32 to vector<8x128xf32>
      %642 = arith.addf %628, %641 : vector<8x128xf32>
      %643 = arith.mulf %642, %637 : vector<8x128xf32>
      %c0_6 = arith.constant 0 : index
      %644 = arith.index_cast %14 : i32 to index
      %c0_7 = arith.constant 0 : index
      %645 = vector.load %arg6[%c0_6, %644, %c0_7] : memref<1x16x128xf32, #tpu.memory_space<vmem>>, vector<1x8x128xf32>
      %646 = vector.shape_cast %645 : vector<1x8x128xf32> to vector<8x128xf32>
      %647 = vector.shape_cast %640 : vector<8x128xf32> to vector<1x8x128xf32>
      tpu.vector_store %arg6[%c0_6, %644, %c0_7], %647 {strides = array<i32>} : memref<1x16x128xf32, #tpu.memory_space<vmem>>, vector<1x8x128xf32>,
      %c0_8 = arith.constant 0 : index
      %648 = arith.index_cast %14 : i32 to index
      %c0_9 = arith.constant 0 : index
      %649 = vector.load %arg7[%c0_8, %648, %c0_9] : memref<1x16x128xf32, #tpu.memory_space<vmem>>, vector<1x8x128xf32>
      %650 = vector.shape_cast %649 : vector<1x8x128xf32> to vector<8x128xf32>
      %651 = vector.shape_cast %643 : vector<8x128xf32> to vector<1x8x128xf32>
      tpu.vector_store %arg7[%c0_8, %648, %c0_9], %651 {strides = array<i32>} : memref<1x16x128xf32, #tpu.memory_space<vmem>>, vector<1x8x128xf32>,
      %652 = vector.extract_strided_slice %16 {offsets = [15, 15], sizes = [8, 128], strides = [1, 1]} : vector<40x256xf32> to vector<8x128xf32>
      %653 = arith.mulf %652, %640 : vector<8x128xf32>
      %c0_10 = arith.constant 0 : index
      %654 = arith.index_cast %14 : i32 to index
      %c0_11 = arith.constant 0 : index
      %655 = vector.load %arg4[%c0_10, %654, %c0_11] : memref<1x16x128xf32, #tpu.memory_space<vmem>>, vector<1x8x128xf32>
      %656 = vector.shape_cast %655 : vector<1x8x128xf32> to vector<8x128xf32>
      %657 = vector.shape_cast %653 : vector<8x128xf32> to vector<1x8x128xf32>
      tpu.vector_store %arg4[%c0_10, %654, %c0_11], %657 {strides = array<i32>} : memref<1x16x128xf32, #tpu.memory_space<vmem>>, vector<1x8x128xf32>,
      %658 = arith.mulf %652, %643 : vector<8x128xf32>
      %c0_12 = arith.constant 0 : index
      %659 = arith.index_cast %14 : i32 to index
      %c0_13 = arith.constant 0 : index
      %660 = vector.load %arg5[%c0_12, %659, %c0_13] : memref<1x16x128xf32, #tpu.memory_space<vmem>>, vector<1x8x128xf32>
      %661 = vector.shape_cast %660 : vector<1x8x128xf32> to vector<8x128xf32>
      %662 = vector.shape_cast %658 : vector<8x128xf32> to vector<1x8x128xf32>
      tpu.vector_store %arg5[%c0_12, %659, %c0_13], %662 {strides = array<i32>} : memref<1x16x128xf32, #tpu.memory_space<vmem>>, vector<1x8x128xf32>,
    }
    %c2_i32_2 = arith.constant 2 : i32
    return
  }
  func.func @transform_1(%arg0: i32, %arg1: i32, %arg2: i32) -> (i32, i32, i32) {
    %c0_i32 = arith.constant 0 : i32
    return %arg0, %arg1, %arg2 : i32, i32, i32
  }
  func.func @transform_2(%arg0: i32, %arg1: i32, %arg2: i32) -> (i32, i32, i32) {
    %c0_i32 = arith.constant 0 : i32
    return %arg0, %arg1, %arg2 : i32, i32, i32
  }
  func.func @transform_3(%arg0: i32, %arg1: i32, %arg2: i32) -> (i32, i32, i32) {
    %c0_i32 = arith.constant 0 : i32
    return %arg0, %arg1, %arg2 : i32, i32, i32
  }
  func.func @transform_4(%arg0: i32, %arg1: i32, %arg2: i32) -> (i32, i32, i32) {
    %c0_i32 = arith.constant 0 : i32
    return %arg0, %arg1, %arg2 : i32, i32, i32
  }
}

</mosaic_0001>

<llo_original>
// kernel: a_call__.1
$region0: #{a_call__.1}
  #allocation0 [shape = 'u32[]', space=smem, size = 0x4, offset = 0x4, fixed_abs, tag = 'smem constant byte address 0x4 - core index']
  #allocation1 [shape = 'u32[144,128]{1,0:T(1,128)}', space=vmem, size = 0x12000, scoped, tag = 'internal scratch']
  #allocation2 [shape = 'f32[48,256]{1,0:T(8,128)}', space=vmem, size = 0xc000, scoped, tag = 'scratch operand']
  #allocation3 [shape = 's32[1]{0}', space=sflag, size = 0x4, scoped, tag = 'scratch operand']
  #allocation11 [shape = 's32[]', space=sflag, size = 0x4, offset = 0, fixed_abs, tag = 'sflag constant byte address 0x0 - dummy sync flag']
  %s0 = inlined_call_operand.vmem [shape: f32[8,48,256], index: 0, kind: input, shape index: {}]
  %s1 = inlined_call_operand.hbm [shape: f32[8,16,16], index: 1, kind: output, shape index: {0}]
  %s2 = inlined_call_operand.hbm [shape: f32[8,16,16], index: 2, kind: output, shape index: {1}]
  %s3 = inlined_call_operand.hbm [shape: f32[8,16,16], index: 3, kind: output, shape index: {2}]
  %s4 = inlined_call_operand.hbm [shape: f32[8,16,16], index: 4, kind: output, shape index: {3}]
  %5 = xla_tuple %s1, %s2, %s3, %s4
  %s6 = sld [smem:[#allocation0]]
  $region90: #{a_call__.1} parent=0
    _
  %s8 = ssub.s32 1, %s6
  %s9 = scalar_select 0, %s8, %s6
  $region1: #{a_call__.1} parent=0
    #allocation4 [shape = 'u8[16384]{0}', space=vmem, size = 0x4000, scoped, tag = 'output window, operand 0']
    #allocation5 [shape = 's32[2]{0}', space=sflag, size = 0x8, scoped, tag = 'scoped memory for a_call__.1']
    #allocation6 [shape = 'u8[16384]{0}', space=vmem, size = 0x4000, scoped, tag = 'output window, operand 1']
    #allocation7 [shape = 's32[2]{0}', space=sflag, size = 0x8, scoped, tag = 'scoped memory for a_call__.1']
    #allocation8 [shape = 'u8[16384]{0}', space=vmem, size = 0x4000, scoped, tag = 'output window, operand 2']
    #allocation9 [shape = 'u8[16384]{0}', space=vmem, size = 0x4000, scoped, tag = 'output window, operand 3']
    #allocation10 [shape = 's32[2]{0}', space=sflag, size = 0x8, scoped, tag = 'scoped memory for a_call__.1']
    %10 = vsyncpa [#allocation5], 0
    %s11 = scalar_lea.sflag [#allocation5], 1
    %12 = vsyncpa %s11, 0
    %13 = vsyncpa [#allocation7], 0
    %s14 = scalar_lea.sflag [#allocation7], 1
    %15 = vsyncpa %s14, 0
    %16 = vsyncpa [#allocation10], 0
    %s17 = scalar_lea.sflag [#allocation10], 1
    %18 = vsyncpa %s17, 0
    loop: start=0, step=1, limit=9
    $region2: #{a_call__.1} parent=1 // loop_pre_header
      _
    $region3: #{a_call__.1} parent=1 // loop_header
      %s20 = sphi 0, %s24
      %p21 = scmp.ge.s32.totalorder %s20, 9
      %s26 = sphi 0, %s42
      %s27 = sphi 0, %s38
      %s28 = sphi 0, %s34
      %s29 = sphi 0, %s26
      %s30 = sphi 0, %s27
      %s31 = sphi 0, %s28
      %s49 = sphi 0, %s51
      %s52 = sphi 0, %s49
      %s62 = sphi 0, %s52
      %s72 = sphi 0, %s74
      %s75 = sphi 0, %s72
      %s85 = sphi 0, %s75
      %s95 = sphi 0, %s97
      %s98 = sphi 0, %s95
      %s108 = sphi 0, %s98
      %s118 = sphi 0, %s120
      %s121 = sphi 0, %s118
      %s131 = sphi 0, %s121
    $region4: #{a_call__.1} parent=1 // loop_header_branch
      %23 = sbr.rel (%p21) target = $region8
    $region5: #{a_call__.1} parent=1 // loop_body
      %s25 = ssub.s32 %s20, 1
      %s32 = sadd.s32 1, %s28
      %p33 = scmp.ge.s32.totalorder %s32, 1
      %s34 = scalar_select %p33, 0, %s32
      %s35 = sadd.s32 1, %s27
      %s36 = scalar_select %p33, %s35, %s27
      %p37 = scmp.ge.s32.totalorder %s36, 1
      %s38 = scalar_select %p37, 0, %s36
      %s39 = sadd.s32 1, %s26
      %s40 = scalar_select %p37, %s39, %s26
      %p41 = scmp.ge.s32.totalorder %s40, 8
      %s42 = scalar_select %p41, 0, %s40
      %s43 = ssub.s32 %s26, %s42
      %s44 = ssub.s32 %s27, %s38
      %s45 = sor.u32 %s43, %s44
      %s46 = ssub.s32 %s28, %s34
      %s47 = sor.u32 %s45, %s46
      %p48 = scmp.eq.s32.totalorder %s47, 0
      %s50 = sadd.s32 %s49, 1
      %s51 = scalar_select %p48, %s49, %s50
      %p53 = pneg %p48
      %p54 = scmp.eq.s32.totalorder %s20, 7
      %p55 = por %p53, %p54
      %p56 = scmp.ne.s32.totalorder %s49, %s52
      %p57 = scmp.eq.s32.totalorder %s20, 0
      %p58 = por %p56, %p57
      %p59 = scmp.ne.s32.totalorder %s49, %s52
      %p60 = scmp.eq.s32.totalorder %s25, 7
      %p61 = por %p59, %p60
      %p63 = scmp.ne.s32.totalorder %s52, %s62
      %p64 = scmp.eq.s32.totalorder %s25, 0
      %p65 = por %p63, %p64
      %s66 = ssub.s32 %s26, %s42
      %s67 = ssub.s32 %s27, %s38
      %s68 = sor.u32 %s66, %s67
      %s69 = ssub.s32 %s28, %s34
      %s70 = sor.u32 %s68, %s69
      %p71 = scmp.eq.s32.totalorder %s70, 0
      %s73 = sadd.s32 %s72, 1
      %s74 = scalar_select %p71, %s72, %s73
      %p76 = pneg %p71
      %p77 = scmp.eq.s32.totalorder %s20, 7
      %p78 = por %p76, %p77
      %p79 = scmp.ne.s32.totalorder %s72, %s75
      %p80 = scmp.eq.s32.totalorder %s20, 0
      %p81 = por %p79, %p80
      %p82 = scmp.ne.s32.totalorder %s72, %s75
      %p83 = scmp.eq.s32.totalorder %s25, 7
      %p84 = por %p82, %p83
      %p86 = scmp.ne.s32.totalorder %s75, %s85
      %p87 = scmp.eq.s32.totalorder %s25, 0
      %p88 = por %p86, %p87
      %s89 = ssub.s32 %s26, %s42
      %s90 = ssub.s32 %s27, %s38
      %s91 = sor.u32 %s89, %s90
      %s92 = ssub.s32 %s28, %s34
      %s93 = sor.u32 %s91, %s92
      %p94 = scmp.eq.s32.totalorder %s93, 0
      %s96 = sadd.s32 %s95, 1
      %s97 = scalar_select %p94, %s95, %s96
      %p99 = pneg %p94
      %p100 = scmp.eq.s32.totalorder %s20, 7
      %p101 = por %p99, %p100
      %p102 = scmp.ne.s32.totalorder %s95, %s98
      %p103 = scmp.eq.s32.totalorder %s20, 0
      %p104 = por %p102, %p103
      %p105 = scmp.ne.s32.totalorder %s95, %s98
      %p106 = scmp.eq.s32.totalorder %s25, 7
      %p107 = por %p105, %p106
      %p109 = scmp.ne.s32.totalorder %s98, %s108
      %p110 = scmp.eq.s32.totalorder %s25, 0
      %p111 = por %p109, %p110
      %s112 = ssub.s32 %s26, %s42
      %s113 = ssub.s32 %s27, %s38
      %s114 = sor.u32 %s112, %s113
      %s115 = ssub.s32 %s28, %s34
      %s116 = sor.u32 %s114, %s115
      %p117 = scmp.eq.s32.totalorder %s116, 0
      %s119 = sadd.s32 %s118, 1
      %s120 = scalar_select %p117, %s118, %s119
      %p122 = pneg %p117
      %p123 = scmp.eq.s32.totalorder %s20, 7
      %p124 = por %p122, %p123
      %p125 = scmp.ne.s32.totalorder %s118, %s121
      %p126 = scmp.eq.s32.totalorder %s20, 0
      %p127 = por %p125, %p126
      %p128 = scmp.ne.s32.totalorder %s118, %s121
      %p129 = scmp.eq.s32.totalorder %s25, 7
      %p130 = por %p128, %p129
      %p132 = scmp.ne.s32.totalorder %s121, %s131
      %p133 = scmp.eq.s32.totalorder %s25, 0
      %p134 = por %p132, %p133
      %p135 = scmp.lt.s32.totalorder %s20, 8
      // Predicated region
      $region9: #{a_call__.1} parent=5 // pred_check
        %p136 = pneg %p135
      $region10: #{a_call__.1} parent=5 // pred_check_branch
        %138 = sbr.rel (%p136) target = $region12
      $region11: #{a_call__.1} parent=5 // pred_region
        %p139 = pneg %p58
        %p140 = pneg %p55
        %s141 = sand.u32 %s49, 1
        %s142 = scalar_lea.sflag [#allocation5], %s141
        %s143 = sand.u32 %s49, 1
        %s144 = smul.addr %s143, 16
        %s145 = scalar_lea.vmem [#allocation4], %s144
        %p146 = pneg %p81
        %p147 = pneg %p78
        %s148 = sand.u32 %s20, 1
        %s149 = scalar_lea.sflag [#allocation7], %s148
        %s150 = sand.u32 %s72, 1
        %s151 = smul.addr %s150, 16
        %s152 = scalar_lea.vmem [#allocation6], %s151
        %p153 = pneg %p104
        %p154 = pneg %p101
        %s155 = sand.u32 %s20, 1
        %s156 = scalar_lea.sflag [#allocation7], %s155
        %s157 = sand.u32 %s95, 1
        %s158 = smul.addr %s157, 16
        %s159 = scalar_lea.vmem [#allocation8], %s158
        %p160 = pneg %p127
        %p161 = pneg %p124
        %s162 = sand.u32 %s118, 1
        %s163 = scalar_lea.sflag [#allocation10], %s162
        %s164 = sand.u32 %s118, 1
        %s165 = smul.addr %s164, 16
        %s166 = scalar_lea.vmem [#allocation9], %s165
        %s167 = smul.u32 2, %s27
        %s168 = smul.u32 2, %s27
        %s169 = smul.u32 2, %s27
        %s170 = smul.u32 2, %s27
        %s171 = smul.u32 %s27, 16
        %s172 = smul.u32 %s28, 128
        %s173 = sshra.s32 %s172, 7
        %s174 = sand.u32 %s172, 127
        %s175 = sshra.s32 %s171, 3
        %s176 = sand.u32 %s171, 7
        %s177 = smul.u32 %s175, 2
        %s178 = sadd.s32 %s173, %s177
        %s179 = smul.u32 %s26, 12
        %s180 = sadd.s32 %s178, %s179
        %s181 = smul.addr %s180, 8
        %s182 = scalar_lea.vmem %s0, %s181
        %p184 = scmp.lt.u32.totalorder 96, 8
        %p185 = pneg %p184
        // Predicated region
        $region13: #{a_call__.1} parent=11 // pred_check
          _
        $region14: #{a_call__.1} parent=11 // pred_check_branch
          %187 = sbr.rel (%p184) target = $region16
        $region15: #{a_call__.1} parent=11 // pred_region
          %s202 = sand.u32 96, 7
          %p203 = scmp.eq.s32.totalorder %s202, 0
          // Predicated region
          $region28: #{a_call__.1} parent=15 // pred_check
            %p204 = pneg %p203
          $region29: #{a_call__.1} parent=15 // pred_check_branch
            %206 = sbr.rel (%p204) target = $region31
          $region30: #{a_call__.1} parent=15 // pred_region
            loop: start=0, step=1, limit=1
            $region32: #{a_call__.1} parent=30 // loop_pre_header
              _
            $region33: #{a_call__.1} parent=30 // loop_header
              %s208 = sphi 0, %s212
              %p209 = scmp.ge.s32.totalorder %s208, 1
              %s213 = sphi %s182, %s182
              %s214 = sphi [#allocation2], [#allocation2]
            $region34: #{a_call__.1} parent=30 // loop_header_branch
              %211 = sbr.rel (%p209) target = $region38
            $region35: #{a_call__.1} parent=30 // loop_body
              %v215 = vld [vmem:[%s213] sm:$0xff]
              %216 = vst [vmem:[%s214] sm:$0xff] %v215
              %v217 = vld [vmem:[%s213 + $0x8] sm:$0xff]
              %218 = vst [vmem:[%s214 + $0x8] sm:$0xff] %v217
              %v219 = vld [vmem:[%s213 + $0x10] sm:$0xff]
              %220 = vst [vmem:[%s214 + $0x10] sm:$0xff] %v219
              %v221 = vld [vmem:[%s213 + $0x18] sm:$0xff]
              %222 = vst [vmem:[%s214 + $0x18] sm:$0xff] %v221
              %v223 = vld [vmem:[%s213 + $0x20] sm:$0xff]
              %224 = vst [vmem:[%s214 + $0x20] sm:$0xff] %v223
              %v225 = vld [vmem:[%s213 + $0x28] sm:$0xff]
              %226 = vst [vmem:[%s214 + $0x28] sm:$0xff] %v225
              %v227 = vld [vmem:[%s213 + $0x30] sm:$0xff]
              %228 = vst [vmem:[%s214 + $0x30] sm:$0xff] %v227
              %v229 = vld [vmem:[%s213 + $0x38] sm:$0xff]
              %230 = vst [vmem:[%s214 + $0x38] sm:$0xff] %v229
              %v231 = vld [vmem:[%s213 + $0x40] sm:$0xff]
              %232 = vst [vmem:[%s214 + $0x40] sm:$0xff] %v231
              %v233 = vld [vmem:[%s213 + $0x48] sm:$0xff]
              %234 = vst [vmem:[%s214 + $0x48] sm:$0xff] %v233
              %v235 = vld [vmem:[%s213 + $0x50] sm:$0xff]
              %236 = vst [vmem:[%s214 + $0x50] sm:$0xff] %v235
              %v237 = vld [vmem:[%s213 + $0x58] sm:$0xff]
              %238 = vst [vmem:[%s214 + $0x58] sm:$0xff] %v237
            $region36: #{a_call__.1} parent=30 // loop_footer
              %s212 = sadd.s32 1, %s208
            $region37: #{a_call__.1} parent=30 // loop_footer_branch
              %207 = sbr.rel target = $region33
            $region38: #{a_call__.1} parent=30 // loop_exit
              _
          $region31: #{a_call__.1} parent=15 // pred_fallthru
            _
          %p239 = pneg %p203
          // Predicated region
          $region39: #{a_call__.1} parent=15 // pred_check
            _
          $region40: #{a_call__.1} parent=15 // pred_check_branch
            %241 = sbr.rel (%p203) target = $region42
          $region41: #{a_call__.1} parent=15 // pred_region
            %s242 = sand.u32 96, 7
          $region42: #{a_call__.1} parent=15 // pred_fallthru
            _
        $region16: #{a_call__.1} parent=11 // pred_fallthru
          _
        // Predicated region
        $region17: #{a_call__.1} parent=11 // pred_check
          %p188 = pneg %p184
        $region18: #{a_call__.1} parent=11 // pred_check_branch
          %190 = sbr.rel (%p188) target = $region20
        $region19: #{a_call__.1} parent=11 // pred_region
          %s191 = sshllo.u32 0, 96
          loop: start=0, step=1, limit=1
          $region21: #{a_call__.1} parent=19 // loop_pre_header
            _
          $region22: #{a_call__.1} parent=19 // loop_header
            %s193 = sphi 0, %s197
            %p194 = scmp.ge.s32.totalorder %s193, 1
            %s198 = sphi %s182, %s182
            %s199 = sphi [#allocation2], [#allocation2]
          $region23: #{a_call__.1} parent=19 // loop_header_branch
            %196 = sbr.rel (%p194) target = $region27
          $region24: #{a_call__.1} parent=19 // loop_body
            %v200 = vld [vmem:[%s198] sm:%s191]
            %201 = vst [vmem:[%s199] sm:%s191] %v200
          $region25: #{a_call__.1} parent=19 // loop_footer
            %s197 = sadd.s32 1, %s193
          $region26: #{a_call__.1} parent=19 // loop_footer_branch
            %192 = sbr.rel target = $region22
          $region27: #{a_call__.1} parent=19 // loop_exit
            _
        $region20: #{a_call__.1} parent=11 // pred_fallthru
          _
        // Predicated region
        $region43: #{a_call__.1} parent=11 // pred_check
          _
        $region44: #{a_call__.1} parent=11 // pred_check_branch
          %245 = sbr.rel (0) target = $region46
        $region45: #{a_call__.1} parent=11 // pred_region
          %246 = vsyncadd [#allocation3], 1536
        $region46: #{a_call__.1} parent=11 // pred_fallthru
          _
        %s247 = smul.u32 8, 6
        %s248 = smul.u32 %s247, 2
        %s249 = sshll.u32 %s248, 4
        %250 = dma.done [#allocation3], %s249
        loop: start=0, step=1, limit=2
        $region47: #{a_call__.1} parent=11 // loop_pre_header
          _
        $region48: #{a_call__.1} parent=11 // loop_header
          %s252 = sphi 0, %s256
          %p253 = scmp.ge.s32.totalorder %s252, 2
        $region49: #{a_call__.1} parent=11 // loop_header_branch
          %255 = sbr.rel (%p253) target = $region53
        $region50: #{a_call__.1} parent=11 // loop_body
          %s257 = smul.u32 %s252, 8
          %s258 = sshra.s32 %s257, 3
          %s259 = sand.u32 %s257, 7
          %s260 = smul.u32 %s258, 2
          %s261 = smul.addr %s260, 8
          %s262 = scalar_lea.vmem [#allocation2], %s261
          %v263 = vld [vmem:[%s262] sm:$0xff]
          %v264 = vld [vmem:[%s262 + $0x8] sm:$0xff]
          %v265 = vld [vmem:[%s262 + $0x10] sm:$0xff]
          %v266 = vld [vmem:[%s262 + $0x18] sm:$0xff]
          %v267 = vld [vmem:[%s262 + $0x20] sm:$0xff]
          %v268 = vld [vmem:[%s262 + $0x28] sm:$0xff]
          %v269 = vld [vmem:[%s262 + $0x30] sm:$0xff]
          %v270 = vld [vmem:[%s262 + $0x38] sm:$0xff]
          %v271 = vld [vmem:[%s262 + $0x40] sm:$0xff]
          %v272 = vld [vmem:[%s262 + $0x48] sm:$0xff]
          %vm277 = vcmask 1046528
          %v278 = vrot.slane %v263, 1
          %v279 = vrot.slane %v265, 1
          %v280 = vsel %vm277, %v278, %v279
          %v281 = vrot.slane %v264, 1
          %v282 = vrot.slane %v266, 1
          %v283 = vsel %vm277, %v281, %v282
          %v286 = vmin.f32 %v263, %v280
          %v287 = vmin.f32 %v264, %v283
          %v288 = vmax.f32 %v263, %v280
          %v289 = vmax.f32 %v264, %v283
          %v292 = vmin.f32 %v265, %v279
          %v293 = vmin.f32 %v266, %v282
          %v294 = vmax.f32 %v265, %v279
          %v295 = vmax.f32 %v266, %v282
          %vm300 = vcmask 1045504
          %v301 = vrot.slane %v286, 2
          %v302 = vrot.slane %v292, 2
          %v303 = vsel %vm300, %v301, %v302
          %v304 = vrot.slane %v287, 2
          %v305 = vrot.slane %v293, 2
          %v306 = vsel %vm300, %v304, %v305
          %v309 = vmin.f32 %v286, %v303
          %v310 = vmin.f32 %v287, %v306
          %v311 = vmax.f32 %v286, %v303
          %v312 = vmax.f32 %v287, %v306
          %v317 = vrot.slane %v288, 2
          %v318 = vrot.slane %v294, 2
          %v319 = vsel %vm300, %v317, %v318
          %v320 = vrot.slane %v289, 2
          %v321 = vrot.slane %v295, 2
          %v322 = vsel %vm300, %v320, %v321
          %v325 = vmin.f32 %v288, %v319
          %v326 = vmin.f32 %v289, %v322
          %v327 = vmax.f32 %v288, %v319
          %v328 = vmax.f32 %v289, %v322
          %v329 = vmin.f32 %v325, %v311
          %v330 = vmin.f32 %v326, %v312
          %v331 = vmax.f32 %v325, %v311
          %v332 = vmax.f32 %v326, %v312
          %v335 = vmin.f32 %v292, %v302
          %v336 = vmin.f32 %v293, %v305
          %v337 = vmax.f32 %v292, %v302
          %v338 = vmax.f32 %v293, %v305
          %v341 = vmin.f32 %v294, %v318
          %v342 = vmin.f32 %v295, %v321
          %v343 = vmax.f32 %v294, %v318
          %v344 = vmax.f32 %v295, %v321
          %v345 = vmin.f32 %v341, %v337
          %v346 = vmin.f32 %v342, %v338
          %v347 = vmax.f32 %v341, %v337
          %v348 = vmax.f32 %v342, %v338
          %vm353 = vcmask 1043456
          %v354 = vrot.slane %v309, 4
          %v355 = vrot.slane %v335, 4
          %v356 = vsel %vm353, %v354, %v355
          %v357 = vrot.slane %v310, 4
          %v358 = vrot.slane %v336, 4
          %v359 = vsel %vm353, %v357, %v358
          %v362 = vmin.f32 %v309, %v356
          %v363 = vmin.f32 %v310, %v359
          %v364 = vmax.f32 %v309, %v356
          %v365 = vmax.f32 %v310, %v359
          %v370 = vrot.slane %v331, 4
          %v371 = vrot.slane %v347, 4
          %v372 = vsel %vm353, %v370, %v371
          %v373 = vrot.slane %v332, 4
          %v374 = vrot.slane %v348, 4
          %v375 = vsel %vm353, %v373, %v374
          %v378 = vmin.f32 %v331, %v372
          %v379 = vmin.f32 %v332, %v375
          %v380 = vmax.f32 %v331, %v372
          %v381 = vmax.f32 %v332, %v375
          %v382 = vmin.f32 %v378, %v364
          %v383 = vmin.f32 %v379, %v365
          %v384 = vmax.f32 %v378, %v364
          %v385 = vmax.f32 %v379, %v365
          %v390 = vrot.slane %v329, 4
          %v391 = vrot.slane %v345, 4
          %v392 = vsel %vm353, %v390, %v391
          %v393 = vrot.slane %v330, 4
          %v394 = vrot.slane %v346, 4
          %v395 = vsel %vm353, %v393, %v394
          %v398 = vmin.f32 %v329, %v392
          %v399 = vmin.f32 %v330, %v395
          %v400 = vmax.f32 %v329, %v392
          %v401 = vmax.f32 %v330, %v395
          %v406 = vrot.slane %v327, 4
          %v407 = vrot.slane %v343, 4
          %v408 = vsel %vm353, %v406, %v407
          %v409 = vrot.slane %v328, 4
          %v410 = vrot.slane %v344, 4
          %v411 = vsel %vm353, %v409, %v410
          %v414 = vmin.f32 %v327, %v408
          %v415 = vmin.f32 %v328, %v411
          %v416 = vmax.f32 %v327, %v408
          %v417 = vmax.f32 %v328, %v411
          %v418 = vmin.f32 %v414, %v400
          %v419 = vmin.f32 %v415, %v401
          %v420 = vmax.f32 %v414, %v400
          %v421 = vmax.f32 %v415, %v401
          %v422 = vmin.f32 %v398, %v382
          %v423 = vmin.f32 %v399, %v383
          %v424 = vmax.f32 %v398, %v382
          %v425 = vmax.f32 %v399, %v383
          %v426 = vmin.f32 %v418, %v384
          %v427 = vmin.f32 %v419, %v385
          %v428 = vmax.f32 %v418, %v384
          %v429 = vmax.f32 %v419, %v385
          %v430 = vmin.f32 %v420, %v380
          %v431 = vmin.f32 %v421, %v381
          %v432 = vmax.f32 %v420, %v380
          %v433 = vmax.f32 %v421, %v381
          %v436 = vrot.slane %v267, 1
          %v437 = vsel %vm277, %v279, %v436
          %v438 = vrot.slane %v268, 1
          %v439 = vsel %vm277, %v282, %v438
          %v442 = vmin.f32 %v265, %v437
          %v443 = vmin.f32 %v266, %v439
          %v444 = vmax.f32 %v265, %v437
          %v445 = vmax.f32 %v266, %v439
          %v448 = vmin.f32 %v267, %v436
          %v449 = vmin.f32 %v268, %v438
          %v450 = vmax.f32 %v267, %v436
          %v451 = vmax.f32 %v268, %v438
          %v456 = vrot.slane %v442, 2
          %v457 = vrot.slane %v448, 2
          %v458 = vsel %vm300, %v456, %v457
          %v459 = vrot.slane %v443, 2
          %v460 = vrot.slane %v449, 2
          %v461 = vsel %vm300, %v459, %v460
          %v464 = vmin.f32 %v442, %v458
          %v465 = vmin.f32 %v443, %v461
          %v466 = vmax.f32 %v442, %v458
          %v467 = vmax.f32 %v443, %v461
          %v472 = vrot.slane %v444, 2
          %v473 = vrot.slane %v450, 2
          %v474 = vsel %vm300, %v472, %v473
          %v475 = vrot.slane %v445, 2
          %v476 = vrot.slane %v451, 2
          %v477 = vsel %vm300, %v475, %v476
          %v480 = vmin.f32 %v444, %v474
          %v481 = vmin.f32 %v445, %v477
          %v482 = vmax.f32 %v444, %v474
          %v483 = vmax.f32 %v445, %v477
          %v484 = vmin.f32 %v480, %v466
          %v485 = vmin.f32 %v481, %v467
          %v486 = vmax.f32 %v480, %v466
          %v487 = vmax.f32 %v481, %v467
          %v490 = vmin.f32 %v448, %v457
          %v491 = vmin.f32 %v449, %v460
          %v492 = vmax.f32 %v448, %v457
          %v493 = vmax.f32 %v449, %v460
          %v496 = vmin.f32 %v450, %v473
          %v497 = vmin.f32 %v451, %v476
          %v498 = vmax.f32 %v450, %v473
          %v499 = vmax.f32 %v451, %v476
          %v500 = vmin.f32 %v496, %v492
          %v501 = vmin.f32 %v497, %v493
          %v502 = vmax.f32 %v496, %v492
          %v503 = vmax.f32 %v497, %v493
          %v508 = vrot.slane %v464, 4
          %v509 = vrot.slane %v490, 4
          %v510 = vsel %vm353, %v508, %v509
          %v511 = vrot.slane %v465, 4
          %v512 = vrot.slane %v491, 4
          %v513 = vsel %vm353, %v511, %v512
          %v516 = vmin.f32 %v464, %v510
          %v517 = vmin.f32 %v465, %v513
          %v518 = vmax.f32 %v464, %v510
          %v519 = vmax.f32 %v465, %v513
          %v524 = vrot.slane %v486, 4
          %v525 = vrot.slane %v502, 4
          %v526 = vsel %vm353, %v524, %v525
          %v527 = vrot.slane %v487, 4
          %v528 = vrot.slane %v503, 4
          %v529 = vsel %vm353, %v527, %v528
          %v532 = vmin.f32 %v486, %v526
          %v533 = vmin.f32 %v487, %v529
          %v534 = vmax.f32 %v486, %v526
          %v535 = vmax.f32 %v487, %v529
          %v536 = vmin.f32 %v532, %v518
          %v537 = vmin.f32 %v533, %v519
          %v538 = vmax.f32 %v532, %v518
          %v539 = vmax.f32 %v533, %v519
          %v544 = vrot.slane %v484, 4
          %v545 = vrot.slane %v500, 4
          %v546 = vsel %vm353, %v544, %v545
          %v547 = vrot.slane %v485, 4
          %v548 = vrot.slane %v501, 4
          %v549 = vsel %vm353, %v547, %v548
          %v552 = vmin.f32 %v484, %v546
          %v553 = vmin.f32 %v485, %v549
          %v554 = vmax.f32 %v484, %v546
          %v555 = vmax.f32 %v485, %v549
          %v560 = vrot.slane %v482, 4
          %v561 = vrot.slane %v498, 4
          %v562 = vsel %vm353, %v560, %v561
          %v563 = vrot.slane %v483, 4
          %v564 = vrot.slane %v499, 4
          %v565 = vsel %vm353, %v563, %v564
          %v568 = vmin.f32 %v482, %v562
          %v569 = vmin.f32 %v483, %v565
          %v570 = vmax.f32 %v482, %v562
          %v571 = vmax.f32 %v483, %v565
          %v572 = vmin.f32 %v568, %v554
          %v573 = vmin.f32 %v569, %v555
          %v574 = vmax.f32 %v568, %v554
          %v575 = vmax.f32 %v569, %v555
          %v576 = vmin.f32 %v552, %v536
          %v577 = vmin.f32 %v553, %v537
          %v578 = vmax.f32 %v552, %v536
          %v579 = vmax.f32 %v553, %v537
          %v580 = vmin.f32 %v572, %v538
          %v581 = vmin.f32 %v573, %v539
          %v582 = vmax.f32 %v572, %v538
          %v583 = vmax.f32 %v573, %v539
          %v584 = vmin.f32 %v574, %v534
          %v585 = vmin.f32 %v575, %v535
          %v586 = vmax.f32 %v574, %v534
          %v587 = vmax.f32 %v575, %v535
          %v588 = vmin.f32 %v362, %v516
          %v589 = vmin.f32 %v363, %v517
          %v590 = vmax.f32 %v362, %v516
          %v591 = vmax.f32 %v363, %v517
          %v592 = vmin.f32 %v428, %v582
          %v593 = vmin.f32 %v429, %v583
          %v594 = vmax.f32 %v428, %v582
          %v595 = vmax.f32 %v429, %v583
          %v596 = vmin.f32 %v592, %v590
          %v597 = vmin.f32 %v593, %v591
          %v598 = vmax.f32 %v592, %v590
          %v599 = vmax.f32 %v593, %v591
          %v600 = vmin.f32 %v424, %v578
          %v601 = vmin.f32 %v425, %v579
          %v602 = vmax.f32 %v424, %v578
          %v603 = vmax.f32 %v425, %v579
          %v604 = vmin.f32 %v432, %v586
          %v605 = vmin.f32 %v433, %v587
          %v606 = vmax.f32 %v432, %v586
          %v607 = vmax.f32 %v433, %v587
          %v608 = vmin.f32 %v604, %v602
          %v609 = vmin.f32 %v605, %v603
          %v610 = vmax.f32 %v604, %v602
          %v611 = vmax.f32 %v605, %v603
          %v612 = vmin.f32 %v600, %v596
          %v613 = vmin.f32 %v601, %v597
          %v614 = vmax.f32 %v600, %v596
          %v615 = vmax.f32 %v601, %v597
          %v616 = vmin.f32 %v608, %v598
          %v617 = vmin.f32 %v609, %v599
          %v618 = vmax.f32 %v608, %v598
          %v619 = vmax.f32 %v609, %v599
          %v620 = vmin.f32 %v610, %v594
          %v621 = vmin.f32 %v611, %v595
          %v622 = vmax.f32 %v610, %v594
          %v623 = vmax.f32 %v611, %v595
          %v624 = vmin.f32 %v422, %v576
          %v625 = vmin.f32 %v423, %v577
          %v626 = vmax.f32 %v422, %v576
          %v627 = vmax.f32 %v423, %v577
          %v628 = vmin.f32 %v430, %v584
          %v629 = vmin.f32 %v431, %v585
          %v630 = vmax.f32 %v430, %v584
          %v631 = vmax.f32 %v431, %v585
          %v632 = vmin.f32 %v628, %v626
          %v633 = vmin.f32 %v629, %v627
          %v634 = vmax.f32 %v628, %v626
          %v635 = vmax.f32 %v629, %v627
          %v636 = vmin.f32 %v426, %v580
          %v637 = vmin.f32 %v427, %v581
          %v638 = vmax.f32 %v426, %v580
          %v639 = vmax.f32 %v427, %v581
          %v640 = vmin.f32 %v416, %v570
          %v641 = vmin.f32 %v417, %v571
          %v642 = vmax.f32 %v416, %v570
          %v643 = vmax.f32 %v417, %v571
          %v644 = vmin.f32 %v640, %v638
          %v645 = vmin.f32 %v641, %v639
          %v646 = vmax.f32 %v640, %v638
          %v647 = vmax.f32 %v641, %v639
          %v648 = vmin.f32 %v636, %v632
          %v649 = vmin.f32 %v637, %v633
          %v650 = vmax.f32 %v636, %v632
          %v651 = vmax.f32 %v637, %v633
          %v652 = vmin.f32 %v644, %v634
          %v653 = vmin.f32 %v645, %v635
          %v654 = vmax.f32 %v644, %v634
          %v655 = vmax.f32 %v645, %v635
          %v656 = vmin.f32 %v646, %v630
          %v657 = vmin.f32 %v647, %v631
          %v658 = vmax.f32 %v646, %v630
          %v659 = vmax.f32 %v647, %v631
          %v660 = vmin.f32 %v624, %v612
          %v661 = vmin.f32 %v625, %v613
          %v662 = vmax.f32 %v624, %v612
          %v663 = vmax.f32 %v625, %v613
          %v664 = vmin.f32 %v648, %v614
          %v665 = vmin.f32 %v649, %v615
          %v666 = vmax.f32 %v648, %v614
          %v667 = vmax.f32 %v649, %v615
          %v668 = vmin.f32 %v650, %v616
          %v669 = vmin.f32 %v651, %v617
          %v670 = vmax.f32 %v650, %v616
          %v671 = vmax.f32 %v651, %v617
          %v672 = vmin.f32 %v652, %v618
          %v673 = vmin.f32 %v653, %v619
          %v674 = vmax.f32 %v652, %v618
          %v675 = vmax.f32 %v653, %v619
          %v676 = vmin.f32 %v654, %v620
          %v677 = vmin.f32 %v655, %v621
          %v678 = vmax.f32 %v654, %v620
          %v679 = vmax.f32 %v655, %v621
          %v680 = vmin.f32 %v656, %v622
          %v681 = vmin.f32 %v657, %v623
          %v682 = vmax.f32 %v656, %v622
          %v683 = vmax.f32 %v657, %v623
          %v684 = vmin.f32 %v658, %v606
          %v685 = vmin.f32 %v659, %v607
          %v686 = vmax.f32 %v658, %v606
          %v687 = vmax.f32 %v659, %v607
          %v690 = vrot.slane %v269, 1
          %v691 = vsel %vm277, %v436, %v690
          %v692 = vrot.slane %v270, 1
          %v693 = vsel %vm277, %v438, %v692
          %v696 = vmin.f32 %v267, %v691
          %v697 = vmin.f32 %v268, %v693
          %v698 = vmax.f32 %v267, %v691
          %v699 = vmax.f32 %v268, %v693
          %v702 = vmin.f32 %v269, %v690
          %v703 = vmin.f32 %v270, %v692
          %v704 = vmax.f32 %v269, %v690
          %v705 = vmax.f32 %v270, %v692
          %v710 = vrot.slane %v696, 2
          %v711 = vrot.slane %v702, 2
          %v712 = vsel %vm300, %v710, %v711
          %v713 = vrot.slane %v697, 2
          %v714 = vrot.slane %v703, 2
          %v715 = vsel %vm300, %v713, %v714
          %v718 = vmin.f32 %v696, %v712
          %v719 = vmin.f32 %v697, %v715
          %v720 = vmax.f32 %v696, %v712
          %v721 = vmax.f32 %v697, %v715
          %v726 = vrot.slane %v698, 2
          %v727 = vrot.slane %v704, 2
          %v728 = vsel %vm300, %v726, %v727
          %v729 = vrot.slane %v699, 2
          %v730 = vrot.slane %v705, 2
          %v731 = vsel %vm300, %v729, %v730
          %v734 = vmin.f32 %v698, %v728
          %v735 = vmin.f32 %v699, %v731
          %v736 = vmax.f32 %v698, %v728
          %v737 = vmax.f32 %v699, %v731
          %v738 = vmin.f32 %v734, %v720
          %v739 = vmin.f32 %v735, %v721
          %v740 = vmax.f32 %v734, %v720
          %v741 = vmax.f32 %v735, %v721
          %v744 = vmin.f32 %v702, %v711
          %v745 = vmin.f32 %v703, %v714
          %v746 = vmax.f32 %v702, %v711
          %v747 = vmax.f32 %v703, %v714
          %v750 = vmin.f32 %v704, %v727
          %v751 = vmin.f32 %v705, %v730
          %v752 = vmax.f32 %v704, %v727
          %v753 = vmax.f32 %v705, %v730
          %v754 = vmin.f32 %v750, %v746
          %v755 = vmin.f32 %v751, %v747
          %v756 = vmax.f32 %v750, %v746
          %v757 = vmax.f32 %v751, %v747
          %v762 = vrot.slane %v718, 4
          %v763 = vrot.slane %v744, 4
          %v764 = vsel %vm353, %v762, %v763
          %v765 = vrot.slane %v719, 4
          %v766 = vrot.slane %v745, 4
          %v767 = vsel %vm353, %v765, %v766
          %v770 = vmin.f32 %v718, %v764
          %v771 = vmin.f32 %v719, %v767
          %v772 = vmax.f32 %v718, %v764
          %v773 = vmax.f32 %v719, %v767
          %v778 = vrot.slane %v740, 4
          %v779 = vrot.slane %v756, 4
          %v780 = vsel %vm353, %v778, %v779
          %v781 = vrot.slane %v741, 4
          %v782 = vrot.slane %v757, 4
          %v783 = vsel %vm353, %v781, %v782
          %v786 = vmin.f32 %v740, %v780
          %v787 = vmin.f32 %v741, %v783
          %v788 = vmax.f32 %v740, %v780
          %v789 = vmax.f32 %v741, %v783
          %v790 = vmin.f32 %v786, %v772
          %v791 = vmin.f32 %v787, %v773
          %v792 = vmax.f32 %v786, %v772
          %v793 = vmax.f32 %v787, %v773
          %v798 = vrot.slane %v738, 4
          %v799 = vrot.slane %v754, 4
          %v800 = vsel %vm353, %v798, %v799
          %v801 = vrot.slane %v739, 4
          %v802 = vrot.slane %v755, 4
          %v803 = vsel %vm353, %v801, %v802
          %v806 = vmin.f32 %v738, %v800
          %v807 = vmin.f32 %v739, %v803
          %v808 = vmax.f32 %v738, %v800
          %v809 = vmax.f32 %v739, %v803
          %v814 = vrot.slane %v736, 4
          %v815 = vrot.slane %v752, 4
          %v816 = vsel %vm353, %v814, %v815
          %v817 = vrot.slane %v737, 4
          %v818 = vrot.slane %v753, 4
          %v819 = vsel %vm353, %v817, %v818
          %v822 = vmin.f32 %v736, %v816
          %v823 = vmin.f32 %v737, %v819
          %v824 = vmax.f32 %v736, %v816
          %v825 = vmax.f32 %v737, %v819
          %v826 = vmin.f32 %v822, %v808
          %v827 = vmin.f32 %v823, %v809
          %v828 = vmax.f32 %v822, %v808
          %v829 = vmax.f32 %v823, %v809
          %v830 = vmin.f32 %v806, %v790
          %v831 = vmin.f32 %v807, %v791
          %v832 = vmax.f32 %v806, %v790
          %v833 = vmax.f32 %v807, %v791
          %v834 = vmin.f32 %v826, %v792
          %v835 = vmin.f32 %v827, %v793
          %v836 = vmax.f32 %v826, %v792
          %v837 = vmax.f32 %v827, %v793
          %v838 = vmin.f32 %v828, %v788
          %v839 = vmin.f32 %v829, %v789
          %v840 = vmax.f32 %v828, %v788
          %v841 = vmax.f32 %v829, %v789
          %v844 = vrot.slane %v271, 1
          %v845 = vsel %vm277, %v690, %v844
          %v846 = vrot.slane %v272, 1
          %v847 = vsel %vm277, %v692, %v846
          %v850 = vmin.f32 %v269, %v845
          %v851 = vmin.f32 %v270, %v847
          %v852 = vmax.f32 %v269, %v845
          %v853 = vmax.f32 %v270, %v847
          %v856 = vmin.f32 %v271, %v844
          %v857 = vmin.f32 %v272, %v846
          %v858 = vmax.f32 %v271, %v844
          %v859 = vmax.f32 %v272, %v846
          %v864 = vrot.slane %v850, 2
          %v865 = vrot.slane %v856, 2
          %v866 = vsel %vm300, %v864, %v865
          %v867 = vrot.slane %v851, 2
          %v868 = vrot.slane %v857, 2
          %v869 = vsel %vm300, %v867, %v868
          %v872 = vmin.f32 %v850, %v866
          %v873 = vmin.f32 %v851, %v869
          %v874 = vmax.f32 %v850, %v866
          %v875 = vmax.f32 %v851, %v869
          %v880 = vrot.slane %v852, 2
          %v881 = vrot.slane %v858, 2
          %v882 = vsel %vm300, %v880, %v881
          %v883 = vrot.slane %v853, 2
          %v884 = vrot.slane %v859, 2
          %v885 = vsel %vm300, %v883, %v884
          %v888 = vmin.f32 %v852, %v882
          %v889 = vmin.f32 %v853, %v885
          %v890 = vmax.f32 %v852, %v882
          %v891 = vmax.f32 %v853, %v885
          %v892 = vmin.f32 %v888, %v874
          %v893 = vmin.f32 %v889, %v875
          %v894 = vmax.f32 %v888, %v874
          %v895 = vmax.f32 %v889, %v875
          %v896 = vrot.slane %v269, 2
          %v897 = vrot.slane %v271, 2
          %v898 = vsel %vm300, %v896, %v897
          %v899 = vrot.slane %v270, 2
          %v900 = vrot.slane %v272, 2
          %v901 = vsel %vm300, %v899, %v900
          %v906 = vmin.f32 %v850, %v898
          %v907 = vmin.f32 %v851, %v901
          %v908 = vmin.f32 %v856, %v897
          %v909 = vmin.f32 %v857, %v900
          %v910 = vmax.f32 %v850, %v898
          %v911 = vmax.f32 %v851, %v901
          %v912 = vmax.f32 %v856, %v897
          %v913 = vmax.f32 %v857, %v900
          %v914 = vmin.f32 %v852, %v910
          %v915 = vmin.f32 %v853, %v911
          %v916 = vmin.f32 %v858, %v912
          %v917 = vmin.f32 %v859, %v913
          %v918 = vmax.f32 %v852, %v910
          %v919 = vmax.f32 %v853, %v911
          %v920 = vmax.f32 %v858, %v912
          %v921 = vmax.f32 %v859, %v913
          %v926 = vrot.slane %v906, 4
          %v927 = vrot.slane %v908, 4
          %v928 = vsel %vm353, %v926, %v927
          %v929 = vrot.slane %v907, 4
          %v930 = vrot.slane %v909, 4
          %v931 = vsel %vm353, %v929, %v930
          %v934 = vmin.f32 %v872, %v928
          %v935 = vmin.f32 %v873, %v931
          %v936 = vmax.f32 %v872, %v928
          %v937 = vmax.f32 %v873, %v931
          %v942 = vrot.slane %v918, 4
          %v943 = vrot.slane %v920, 4
          %v944 = vsel %vm353, %v942, %v943
          %v945 = vrot.slane %v919, 4
          %v946 = vrot.slane %v921, 4
          %v947 = vsel %vm353, %v945, %v946
          %v950 = vmin.f32 %v894, %v944
          %v951 = vmin.f32 %v895, %v947
          %v952 = vmax.f32 %v894, %v944
          %v953 = vmax.f32 %v895, %v947
          %v954 = vmin.f32 %v950, %v936
          %v955 = vmin.f32 %v951, %v937
          %v956 = vmax.f32 %v950, %v936
          %v957 = vmax.f32 %v951, %v937
          %v962 = vrot.slane %v914, 4
          %v963 = vrot.slane %v916, 4
          %v964 = vsel %vm353, %v962, %v963
          %v965 = vrot.slane %v915, 4
          %v966 = vrot.slane %v917, 4
          %v967 = vsel %vm353, %v965, %v966
          %v970 = vmin.f32 %v892, %v964
          %v971 = vmin.f32 %v893, %v967
          %v972 = vmax.f32 %v892, %v964
          %v973 = vmax.f32 %v893, %v967
          %v974 = vmin.f32 %v890, %v972
          %v975 = vmin.f32 %v891, %v973
          %v976 = vmax.f32 %v890, %v972
          %v977 = vmax.f32 %v891, %v973
          %v978 = vmin.f32 %v970, %v954
          %v979 = vmin.f32 %v971, %v955
          %v980 = vmax.f32 %v970, %v954
          %v981 = vmax.f32 %v971, %v955
          %v982 = vmin.f32 %v974, %v956
          %v983 = vmin.f32 %v975, %v957
          %v984 = vmax.f32 %v974, %v956
          %v985 = vmax.f32 %v975, %v957
          %v986 = vmin.f32 %v976, %v952
          %v987 = vmin.f32 %v977, %v953
          %v988 = vmax.f32 %v976, %v952
          %v989 = vmax.f32 %v977, %v953
          %v990 = vmin.f32 %v770, %v934
          %v991 = vmin.f32 %v771, %v935
          %v992 = vmax.f32 %v770, %v934
          %v993 = vmax.f32 %v771, %v935
          %v994 = vmin.f32 %v836, %v984
          %v995 = vmin.f32 %v837, %v985
          %v996 = vmax.f32 %v836, %v984
          %v997 = vmax.f32 %v837, %v985
          %v998 = vmin.f32 %v994, %v992
          %v999 = vmin.f32 %v995, %v993
          %v1000 = vmax.f32 %v994, %v992
          %v1001 = vmax.f32 %v995, %v993
          %v1002 = vmin.f32 %v832, %v980
          %v1003 = vmin.f32 %v833, %v981
          %v1004 = vmax.f32 %v832, %v980
          %v1005 = vmax.f32 %v833, %v981
          %v1006 = vmin.f32 %v840, %v988
          %v1007 = vmin.f32 %v841, %v989
          %v1008 = vmax.f32 %v840, %v988
          %v1009 = vmax.f32 %v841, %v989
          %v1010 = vmin.f32 %v1006, %v1004
          %v1011 = vmin.f32 %v1007, %v1005
          %v1012 = vmax.f32 %v1006, %v1004
          %v1013 = vmax.f32 %v1007, %v1005
          %v1014 = vmin.f32 %v1002, %v998
          %v1015 = vmin.f32 %v1003, %v999
          %v1016 = vmax.f32 %v1002, %v998
          %v1017 = vmax.f32 %v1003, %v999
          %v1018 = vmin.f32 %v1010, %v1000
          %v1019 = vmin.f32 %v1011, %v1001
          %v1020 = vmax.f32 %v1010, %v1000
          %v1021 = vmax.f32 %v1011, %v1001
          %v1022 = vmin.f32 %v1012, %v996
          %v1023 = vmin.f32 %v1013, %v997
          %v1024 = vmax.f32 %v1012, %v996
          %v1025 = vmax.f32 %v1013, %v997
          %v1026 = vmin.f32 %v830, %v978
          %v1027 = vmin.f32 %v831, %v979
          %v1028 = vmax.f32 %v830, %v978
          %v1029 = vmax.f32 %v831, %v979
          %v1030 = vmin.f32 %v838, %v986
          %v1031 = vmin.f32 %v839, %v987
          %v1032 = vmax.f32 %v838, %v986
          %v1033 = vmax.f32 %v839, %v987
          %v1034 = vmin.f32 %v1030, %v1028
          %v1035 = vmin.f32 %v1031, %v1029
          %v1036 = vmax.f32 %v1030, %v1028
          %v1037 = vmax.f32 %v1031, %v1029
          %v1038 = vmin.f32 %v834, %v982
          %v1039 = vmin.f32 %v835, %v983
          %v1040 = vmax.f32 %v834, %v982
          %v1041 = vmax.f32 %v835, %v983
          %v1042 = vmin.f32 %v824, %v1040
          %v1043 = vmin.f32 %v825, %v1041
          %v1044 = vmax.f32 %v824, %v1040
          %v1045 = vmax.f32 %v825, %v1041
          %v1046 = vmin.f32 %v1038, %v1034
          %v1047 = vmin.f32 %v1039, %v1035
          %v1048 = vmax.f32 %v1038, %v1034
          %v1049 = vmax.f32 %v1039, %v1035
          %v1050 = vmin.f32 %v1042, %v1036
          %v1051 = vmin.f32 %v1043, %v1037
          %v1052 = vmax.f32 %v1042, %v1036
          %v1053 = vmax.f32 %v1043, %v1037
          %v1054 = vmin.f32 %v1044, %v1032
          %v1055 = vmin.f32 %v1045, %v1033
          %v1056 = vmax.f32 %v1044, %v1032
          %v1057 = vmax.f32 %v1045, %v1033
          %v1058 = vmin.f32 %v1026, %v1014
          %v1059 = vmin.f32 %v1027, %v1015
          %v1060 = vmax.f32 %v1026, %v1014
          %v1061 = vmax.f32 %v1027, %v1015
          %v1062 = vmin.f32 %v1046, %v1016
          %v1063 = vmin.f32 %v1047, %v1017
          %v1064 = vmax.f32 %v1046, %v1016
          %v1065 = vmax.f32 %v1047, %v1017
          %v1066 = vmin.f32 %v1048, %v1018
          %v1067 = vmin.f32 %v1049, %v1019
          %v1068 = vmax.f32 %v1048, %v1018
          %v1069 = vmax.f32 %v1049, %v1019
          %v1070 = vmin.f32 %v1050, %v1020
          %v1071 = vmin.f32 %v1051, %v1021
          %v1072 = vmax.f32 %v1050, %v1020
          %v1073 = vmax.f32 %v1051, %v1021
          %v1074 = vmin.f32 %v1052, %v1022
          %v1075 = vmin.f32 %v1053, %v1023
          %v1076 = vmax.f32 %v1052, %v1022
          %v1077 = vmax.f32 %v1053, %v1023
          %v1078 = vmin.f32 %v1054, %v1024
          %v1079 = vmin.f32 %v1055, %v1025
          %v1080 = vmax.f32 %v1054, %v1024
          %v1081 = vmax.f32 %v1055, %v1025
          %v1082 = vmin.f32 %v1056, %v1008
          %v1083 = vmin.f32 %v1057, %v1009
          %v1084 = vmax.f32 %v1056, %v1008
          %v1085 = vmax.f32 %v1057, %v1009
          %v1086 = vmax.f32 %v588, %v990
          %v1087 = vmax.f32 %v589, %v991
          %v1088 = vmin.f32 %v674, %v1072
          %v1089 = vmin.f32 %v675, %v1073
          %v1090 = vmax.f32 %v1088, %v1086
          %v1091 = vmax.f32 %v1089, %v1087
          %v1092 = vmax.f32 %v666, %v1064
          %v1093 = vmax.f32 %v667, %v1065
          %v1094 = vmin.f32 %v682, %v1080
          %v1095 = vmin.f32 %v683, %v1081
          %v1096 = vmin.f32 %v1094, %v1092
          %v1097 = vmin.f32 %v1095, %v1093
          %v1098 = vmax.f32 %v1096, %v1090
          %v1099 = vmax.f32 %v1097, %v1091
          %v1100 = vmax.f32 %v662, %v1060
          %v1101 = vmax.f32 %v663, %v1061
          %v1102 = vmin.f32 %v678, %v1076
          %v1103 = vmin.f32 %v679, %v1077
          %v1104 = vmax.f32 %v1102, %v1100
          %v1105 = vmax.f32 %v1103, %v1101
          %v1106 = vmax.f32 %v670, %v1068
          %v1107 = vmax.f32 %v671, %v1069
          %v1108 = vmin.f32 %v686, %v1084
          %v1109 = vmin.f32 %v687, %v1085
          %v1110 = vmin.f32 %v1108, %v1106
          %v1111 = vmin.f32 %v1109, %v1107
          %v1112 = vmin.f32 %v1110, %v1104
          %v1113 = vmin.f32 %v1111, %v1105
          %v1114 = vmax.f32 %v1112, %v1098
          %v1115 = vmax.f32 %v1113, %v1099
          %v1116 = vmax.f32 %v660, %v1058
          %v1117 = vmax.f32 %v661, %v1059
          %v1118 = vmin.f32 %v676, %v1074
          %v1119 = vmin.f32 %v677, %v1075
          %v1120 = vmax.f32 %v1118, %v1116
          %v1121 = vmax.f32 %v1119, %v1117
          %v1122 = vmax.f32 %v668, %v1066
          %v1123 = vmax.f32 %v669, %v1067
          %v1124 = vmin.f32 %v684, %v1082
          %v1125 = vmin.f32 %v685, %v1083
          %v1126 = vmin.f32 %v1124, %v1122
          %v1127 = vmin.f32 %v1125, %v1123
          %v1128 = vmax.f32 %v1126, %v1120
          %v1129 = vmax.f32 %v1127, %v1121
          %v1130 = vmax.f32 %v664, %v1062
          %v1131 = vmax.f32 %v665, %v1063
          %v1132 = vmin.f32 %v680, %v1078
          %v1133 = vmin.f32 %v681, %v1079
          %v1134 = vmax.f32 %v1132, %v1130
          %v1135 = vmax.f32 %v1133, %v1131
          %v1136 = vmax.f32 %v672, %v1070
          %v1137 = vmax.f32 %v673, %v1071
          %v1138 = vmin.f32 %v642, %v1136
          %v1139 = vmin.f32 %v643, %v1137
          %v1140 = vmin.f32 %v1138, %v1134
          %v1141 = vmin.f32 %v1139, %v1135
          %v1142 = vmin.f32 %v1140, %v1128
          %v1143 = vmin.f32 %v1141, %v1129
          %v1144 = vmin.f32 %v1142, %v1114
          %v1145 = vmin.f32 %v1143, %v1115
          %1146 = vrot.lane.b32.xlu0 %v265, 127
          %v1147 = vpop.permute.xlu0 %1146
          %1148 = vrot.lane.b32.xlu0 %v266, 127
          %v1149 = vpop.permute.xlu0 %1148
          %1150 = vrot.lane.b32.xlu0 %v267, 127
          %v1151 = vpop.permute.xlu0 %1150
          %1152 = vrot.lane.b32.xlu0 %v268, 127
          %v1153 = vpop.permute.xlu0 %1152
          %vm1154 = vcmask 1039360
          %v1155 = vsel %vm1154, %v1147, %v1149
          %v1156 = vsel %vm1154, %v1151, %v1153
          %v1159 = vmin.f32 %v265, %v1155
          %v1160 = vmin.f32 %v267, %v1156
          %v1161 = vmax.f32 %v265, %v1155
          %v1162 = vmax.f32 %v267, %v1156
          %v1165 = vmin.f32 %v266, %v1149
          %v1166 = vmin.f32 %v268, %v1153
          %v1167 = vmax.f32 %v266, %v1149
          %v1168 = vmax.f32 %v268, %v1153
          %1173 = vrot.lane.b32.xlu0 %v1159, 126
          %v1174 = vpop.permute.xlu0 %1173
          %1175 = vrot.lane.b32.xlu0 %v1165, 126
          %v1176 = vpop.permute.xlu0 %1175
          %1177 = vrot.lane.b32.xlu0 %v1160, 126
          %v1178 = vpop.permute.xlu0 %1177
          %1179 = vrot.lane.b32.xlu0 %v1166, 126
          %v1180 = vpop.permute.xlu0 %1179
          %vm1181 = vcmask 1031168
          %v1182 = vsel %vm1181, %v1174, %v1176
          %v1183 = vsel %vm1181, %v1178, %v1180
          %v1186 = vmin.f32 %v1159, %v1182
          %v1187 = vmin.f32 %v1160, %v1183
          %v1188 = vmax.f32 %v1159, %v1182
          %v1189 = vmax.f32 %v1160, %v1183
          %1194 = vrot.lane.b32.xlu0 %v1161, 126
          %v1195 = vpop.permute.xlu0 %1194
          %1196 = vrot.lane.b32.xlu0 %v1167, 126
          %v1197 = vpop.permute.xlu0 %1196
          %1198 = vrot.lane.b32.xlu0 %v1162, 126
          %v1199 = vpop.permute.xlu0 %1198
          %1200 = vrot.lane.b32.xlu0 %v1168, 126
          %v1201 = vpop.permute.xlu0 %1200
          %v1202 = vsel %vm1181, %v1195, %v1197
          %v1203 = vsel %vm1181, %v1199, %v1201
          %v1206 = vmin.f32 %v1161, %v1202
          %v1207 = vmin.f32 %v1162, %v1203
          %v1208 = vmax.f32 %v1161, %v1202
          %v1209 = vmax.f32 %v1162, %v1203
          %v1210 = vmin.f32 %v1206, %v1188
          %v1211 = vmin.f32 %v1207, %v1189
          %v1212 = vmax.f32 %v1206, %v1188
          %v1213 = vmax.f32 %v1207, %v1189
          %v1216 = vmin.f32 %v1165, %v1176
          %v1217 = vmin.f32 %v1166, %v1180
          %v1218 = vmax.f32 %v1165, %v1176
          %v1219 = vmax.f32 %v1166, %v1180
          %v1222 = vmin.f32 %v1167, %v1197
          %v1223 = vmin.f32 %v1168, %v1201
          %v1224 = vmax.f32 %v1167, %v1197
          %v1225 = vmax.f32 %v1168, %v1201
          %v1226 = vmin.f32 %v1222, %v1218
          %v1227 = vmin.f32 %v1223, %v1219
          %v1228 = vmax.f32 %v1222, %v1218
          %v1229 = vmax.f32 %v1223, %v1219
          %1234 = vrot.lane.b32.xlu0 %v1186, 124
          %v1235 = vpop.permute.xlu0 %1234
          %1236 = vrot.lane.b32.xlu0 %v1216, 124
          %v1237 = vpop.permute.xlu0 %1236
          %1238 = vrot.lane.b32.xlu0 %v1187, 124
          %v1239 = vpop.permute.xlu0 %1238
          %1240 = vrot.lane.b32.xlu0 %v1217, 124
          %v1241 = vpop.permute.xlu0 %1240
          %vm1242 = vcmask 1014784
          %v1243 = vsel %vm1242, %v1235, %v1237
          %v1244 = vsel %vm1242, %v1239, %v1241
          %v1247 = vmin.f32 %v1186, %v1243
          %v1248 = vmin.f32 %v1187, %v1244
          %v1249 = vmax.f32 %v1186, %v1243
          %v1250 = vmax.f32 %v1187, %v1244
          %1255 = vrot.lane.b32.xlu0 %v1212, 124
          %v1256 = vpop.permute.xlu0 %1255
          %1257 = vrot.lane.b32.xlu0 %v1228, 124
          %v1258 = vpop.permute.xlu0 %1257
          %1259 = vrot.lane.b32.xlu0 %v1213, 124
          %v1260 = vpop.permute.xlu0 %1259
          %1261 = vrot.lane.b32.xlu0 %v1229, 124
          %v1262 = vpop.permute.xlu0 %1261
          %v1263 = vsel %vm1242, %v1256, %v1258
          %v1264 = vsel %vm1242, %v1260, %v1262
          %v1267 = vmin.f32 %v1212, %v1263
          %v1268 = vmin.f32 %v1213, %v1264
          %v1269 = vmax.f32 %v1212, %v1263
          %v1270 = vmax.f32 %v1213, %v1264
          %v1271 = vmin.f32 %v1267, %v1249
          %v1272 = vmin.f32 %v1268, %v1250
          %v1273 = vmax.f32 %v1267, %v1249
          %v1274 = vmax.f32 %v1268, %v1250
          %1279 = vrot.lane.b32.xlu0 %v1210, 124
          %v1280 = vpop.permute.xlu0 %1279
          %1281 = vrot.lane.b32.xlu0 %v1226, 124
          %v1282 = vpop.permute.xlu0 %1281
          %1283 = vrot.lane.b32.xlu0 %v1211, 124
          %v1284 = vpop.permute.xlu0 %1283
          %1285 = vrot.lane.b32.xlu0 %v1227, 124
          %v1286 = vpop.permute.xlu0 %1285
          %v1287 = vsel %vm1242, %v1280, %v1282
          %v1288 = vsel %vm1242, %v1284, %v1286
          %v1291 = vmin.f32 %v1210, %v1287
          %v1292 = vmin.f32 %v1211, %v1288
          %v1293 = vmax.f32 %v1210, %v1287
          %v1294 = vmax.f32 %v1211, %v1288
          %1299 = vrot.lane.b32.xlu0 %v1208, 124
          %v1300 = vpop.permute.xlu0 %1299
          %1301 = vrot.lane.b32.xlu0 %v1224, 124
          %v1302 = vpop.permute.xlu0 %1301
          %1303 = vrot.lane.b32.xlu0 %v1209, 124
          %v1304 = vpop.permute.xlu0 %1303
          %1305 = vrot.lane.b32.xlu0 %v1225, 124
          %v1306 = vpop.permute.xlu0 %1305
          %v1307 = vsel %vm1242, %v1300, %v1302
          %v1308 = vsel %vm1242, %v1304, %v1306
          %v1311 = vmin.f32 %v1208, %v1307
          %v1312 = vmin.f32 %v1209, %v1308
          %v1313 = vmax.f32 %v1208, %v1307
          %v1314 = vmax.f32 %v1209, %v1308
          %v1315 = vmin.f32 %v1311, %v1293
          %v1316 = vmin.f32 %v1312, %v1294
          %v1317 = vmax.f32 %v1311, %v1293
          %v1318 = vmax.f32 %v1312, %v1294
          %v1319 = vmin.f32 %v1291, %v1271
          %v1320 = vmin.f32 %v1292, %v1272
          %v1321 = vmax.f32 %v1291, %v1271
          %v1322 = vmax.f32 %v1292, %v1272
          %v1323 = vmin.f32 %v1315, %v1273
          %v1324 = vmin.f32 %v1316, %v1274
          %v1325 = vmax.f32 %v1315, %v1273
          %v1326 = vmax.f32 %v1316, %v1274
          %v1327 = vmin.f32 %v1317, %v1269
          %v1328 = vmin.f32 %v1318, %v1270
          %v1329 = vmax.f32 %v1317, %v1269
          %v1330 = vmax.f32 %v1318, %v1270
          %v1333 = vmin.f32 %v1216, %v1237
          %v1334 = vmin.f32 %v1217, %v1241
          %v1335 = vmax.f32 %v1216, %v1237
          %v1336 = vmax.f32 %v1217, %v1241
          %v1339 = vmin.f32 %v1228, %v1258
          %v1340 = vmin.f32 %v1229, %v1262
          %v1341 = vmax.f32 %v1228, %v1258
          %v1342 = vmax.f32 %v1229, %v1262
          %v1343 = vmin.f32 %v1339, %v1335
          %v1344 = vmin.f32 %v1340, %v1336
          %v1345 = vmax.f32 %v1339, %v1335
          %v1346 = vmax.f32 %v1340, %v1336
          %v1349 = vmin.f32 %v1226, %v1282
          %v1350 = vmin.f32 %v1227, %v1286
          %v1351 = vmax.f32 %v1226, %v1282
          %v1352 = vmax.f32 %v1227, %v1286
          %v1355 = vmin.f32 %v1224, %v1302
          %v1356 = vmin.f32 %v1225, %v1306
          %v1357 = vmax.f32 %v1224, %v1302
          %v1358 = vmax.f32 %v1225, %v1306
          %v1359 = vmin.f32 %v1355, %v1351
          %v1360 = vmin.f32 %v1356, %v1352
          %v1361 = vmax.f32 %v1355, %v1351
          %v1362 = vmax.f32 %v1356, %v1352
          %v1363 = vmin.f32 %v1349, %v1343
          %v1364 = vmin.f32 %v1350, %v1344
          %v1365 = vmax.f32 %v1349, %v1343
          %v1366 = vmax.f32 %v1350, %v1344
          %v1367 = vmin.f32 %v1359, %v1345
          %v1368 = vmin.f32 %v1360, %v1346
          %v1369 = vmax.f32 %v1359, %v1345
          %v1370 = vmax.f32 %v1360, %v1346
          %v1371 = vmin.f32 %v1361, %v1341
          %v1372 = vmin.f32 %v1362, %v1342
          %v1373 = vmax.f32 %v1361, %v1341
          %v1374 = vmax.f32 %v1362, %v1342
          %1379 = vrot.lane.b32.xlu0 %v1247, 120
          %v1380 = vpop.permute.xlu0 %1379
          %1381 = vrot.lane.b32.xlu0 %v1333, 120
          %v1382 = vpop.permute.xlu0 %1381
          %1383 = vrot.lane.b32.xlu0 %v1248, 120
          %v1384 = vpop.permute.xlu0 %1383
          %1385 = vrot.lane.b32.xlu0 %v1334, 120
          %v1386 = vpop.permute.xlu0 %1385
          %vm1387 = vcmask 982016
          %v1388 = vsel %vm1387, %v1380, %v1382
          %v1389 = vsel %vm1387, %v1384, %v1386
          %v1392 = vmin.f32 %v1247, %v1388
          %v1393 = vmin.f32 %v1248, %v1389
          %v1394 = vmax.f32 %v1247, %v1388
          %v1395 = vmax.f32 %v1248, %v1389
          %1400 = vrot.lane.b32.xlu0 %v1325, 120
          %v1401 = vpop.permute.xlu0 %1400
          %1402 = vrot.lane.b32.xlu0 %v1369, 120
          %v1403 = vpop.permute.xlu0 %1402
          %1404 = vrot.lane.b32.xlu0 %v1326, 120
          %v1405 = vpop.permute.xlu0 %1404
          %1406 = vrot.lane.b32.xlu0 %v1370, 120
          %v1407 = vpop.permute.xlu0 %1406
          %v1408 = vsel %vm1387, %v1401, %v1403
          %v1409 = vsel %vm1387, %v1405, %v1407
          %v1412 = vmin.f32 %v1325, %v1408
          %v1413 = vmin.f32 %v1326, %v1409
          %v1414 = vmax.f32 %v1325, %v1408
          %v1415 = vmax.f32 %v1326, %v1409
          %v1416 = vmin.f32 %v1412, %v1394
          %v1417 = vmin.f32 %v1413, %v1395
          %v1418 = vmax.f32 %v1412, %v1394
          %v1419 = vmax.f32 %v1413, %v1395
          %1424 = vrot.lane.b32.xlu0 %v1321, 120
          %v1425 = vpop.permute.xlu0 %1424
          %1426 = vrot.lane.b32.xlu0 %v1365, 120
          %v1427 = vpop.permute.xlu0 %1426
          %1428 = vrot.lane.b32.xlu0 %v1322, 120
          %v1429 = vpop.permute.xlu0 %1428
          %1430 = vrot.lane.b32.xlu0 %v1366, 120
          %v1431 = vpop.permute.xlu0 %1430
          %v1432 = vsel %vm1387, %v1425, %v1427
          %v1433 = vsel %vm1387, %v1429, %v1431
          %v1436 = vmin.f32 %v1321, %v1432
          %v1437 = vmin.f32 %v1322, %v1433
          %v1438 = vmax.f32 %v1321, %v1432
          %v1439 = vmax.f32 %v1322, %v1433
          %1444 = vrot.lane.b32.xlu0 %v1329, 120
          %v1445 = vpop.permute.xlu0 %1444
          %1446 = vrot.lane.b32.xlu0 %v1373, 120
          %v1447 = vpop.permute.xlu0 %1446
          %1448 = vrot.lane.b32.xlu0 %v1330, 120
          %v1449 = vpop.permute.xlu0 %1448
          %1450 = vrot.lane.b32.xlu0 %v1374, 120
          %v1451 = vpop.permute.xlu0 %1450
          %v1452 = vsel %vm1387, %v1445, %v1447
          %v1453 = vsel %vm1387, %v1449, %v1451
          %v1456 = vmin.f32 %v1329, %v1452
          %v1457 = vmin.f32 %v1330, %v1453
          %v1458 = vmax.f32 %v1329, %v1452
          %v1459 = vmax.f32 %v1330, %v1453
          %v1460 = vmin.f32 %v1456, %v1438
          %v1461 = vmin.f32 %v1457, %v1439
          %v1462 = vmax.f32 %v1456, %v1438
          %v1463 = vmax.f32 %v1457, %v1439
          %v1464 = vmin.f32 %v1436, %v1416
          %v1465 = vmin.f32 %v1437, %v1417
          %v1466 = vmax.f32 %v1436, %v1416
          %v1467 = vmax.f32 %v1437, %v1417
          %v1468 = vmin.f32 %v1460, %v1418
          %v1469 = vmin.f32 %v1461, %v1419
          %v1470 = vmax.f32 %v1460, %v1418
          %v1471 = vmax.f32 %v1461, %v1419
          %v1472 = vmin.f32 %v1462, %v1414
          %v1473 = vmin.f32 %v1463, %v1415
          %v1474 = vmax.f32 %v1462, %v1414
          %v1475 = vmax.f32 %v1463, %v1415
          %1480 = vrot.lane.b32.xlu0 %v1319, 120
          %v1481 = vpop.permute.xlu0 %1480
          %1482 = vrot.lane.b32.xlu0 %v1363, 120
          %v1483 = vpop.permute.xlu0 %1482
          %1484 = vrot.lane.b32.xlu0 %v1320, 120
          %v1485 = vpop.permute.xlu0 %1484
          %1486 = vrot.lane.b32.xlu0 %v1364, 120
          %v1487 = vpop.permute.xlu0 %1486
          %v1488 = vsel %vm1387, %v1481, %v1483
          %v1489 = vsel %vm1387, %v1485, %v1487
          %v1492 = vmin.f32 %v1319, %v1488
          %v1493 = vmin.f32 %v1320, %v1489
          %v1494 = vmax.f32 %v1319, %v1488
          %v1495 = vmax.f32 %v1320, %v1489
          %1500 = vrot.lane.b32.xlu0 %v1327, 120
          %v1501 = vpop.permute.xlu0 %1500
          %1502 = vrot.lane.b32.xlu0 %v1371, 120
          %v1503 = vpop.permute.xlu0 %1502
          %1504 = vrot.lane.b32.xlu0 %v1328, 120
          %v1505 = vpop.permute.xlu0 %1504
          %1506 = vrot.lane.b32.xlu0 %v1372, 120
          %v1507 = vpop.permute.xlu0 %1506
          %v1508 = vsel %vm1387, %v1501, %v1503
          %v1509 = vsel %vm1387, %v1505, %v1507
          %v1512 = vmin.f32 %v1327, %v1508
          %v1513 = vmin.f32 %v1328, %v1509
          %v1514 = vmax.f32 %v1327, %v1508
          %v1515 = vmax.f32 %v1328, %v1509
          %v1516 = vmin.f32 %v1512, %v1494
          %v1517 = vmin.f32 %v1513, %v1495
          %v1518 = vmax.f32 %v1512, %v1494
          %v1519 = vmax.f32 %v1513, %v1495
          %1524 = vrot.lane.b32.xlu0 %v1323, 120
          %v1525 = vpop.permute.xlu0 %1524
          %1526 = vrot.lane.b32.xlu0 %v1367, 120
          %v1527 = vpop.permute.xlu0 %1526
          %1528 = vrot.lane.b32.xlu0 %v1324, 120
          %v1529 = vpop.permute.xlu0 %1528
          %1530 = vrot.lane.b32.xlu0 %v1368, 120
          %v1531 = vpop.permute.xlu0 %1530
          %v1532 = vsel %vm1387, %v1525, %v1527
          %v1533 = vsel %vm1387, %v1529, %v1531
          %v1536 = vmin.f32 %v1323, %v1532
          %v1537 = vmin.f32 %v1324, %v1533
          %v1538 = vmax.f32 %v1323, %v1532
          %v1539 = vmax.f32 %v1324, %v1533
          %1544 = vrot.lane.b32.xlu0 %v1313, 120
          %v1545 = vpop.permute.xlu0 %1544
          %1546 = vrot.lane.b32.xlu0 %v1357, 120
          %v1547 = vpop.permute.xlu0 %1546
          %1548 = vrot.lane.b32.xlu0 %v1314, 120
          %v1549 = vpop.permute.xlu0 %1548
          %1550 = vrot.lane.b32.xlu0 %v1358, 120
          %v1551 = vpop.permute.xlu0 %1550
          %v1552 = vsel %vm1387, %v1545, %v1547
          %v1553 = vsel %vm1387, %v1549, %v1551
          %v1556 = vmin.f32 %v1313, %v1552
          %v1557 = vmin.f32 %v1314, %v1553
          %v1558 = vmax.f32 %v1313, %v1552
          %v1559 = vmax.f32 %v1314, %v1553
          %v1560 = vmin.f32 %v1556, %v1538
          %v1561 = vmin.f32 %v1557, %v1539
          %v1562 = vmax.f32 %v1556, %v1538
          %v1563 = vmax.f32 %v1557, %v1539
          %v1564 = vmin.f32 %v1536, %v1516
          %v1565 = vmin.f32 %v1537, %v1517
          %v1566 = vmax.f32 %v1536, %v1516
          %v1567 = vmax.f32 %v1537, %v1517
          %v1568 = vmin.f32 %v1560, %v1518
          %v1569 = vmin.f32 %v1561, %v1519
          %v1570 = vmax.f32 %v1560, %v1518
          %v1571 = vmax.f32 %v1561, %v1519
          %v1572 = vmin.f32 %v1562, %v1514
          %v1573 = vmin.f32 %v1563, %v1515
          %v1574 = vmax.f32 %v1562, %v1514
          %v1575 = vmax.f32 %v1563, %v1515
          %v1576 = vmin.f32 %v1492, %v1464
          %v1577 = vmin.f32 %v1493, %v1465
          %v1578 = vmax.f32 %v1492, %v1464
          %v1579 = vmax.f32 %v1493, %v1465
          %v1580 = vmin.f32 %v1564, %v1466
          %v1581 = vmin.f32 %v1565, %v1467
          %v1582 = vmax.f32 %v1564, %v1466
          %v1583 = vmax.f32 %v1565, %v1467
          %v1584 = vmin.f32 %v1566, %v1468
          %v1585 = vmin.f32 %v1567, %v1469
          %v1586 = vmax.f32 %v1566, %v1468
          %v1587 = vmax.f32 %v1567, %v1469
          %v1588 = vmin.f32 %v1568, %v1470
          %v1589 = vmin.f32 %v1569, %v1471
          %v1590 = vmax.f32 %v1568, %v1470
          %v1591 = vmax.f32 %v1569, %v1471
          %v1592 = vmin.f32 %v1570, %v1472
          %v1593 = vmin.f32 %v1571, %v1473
          %v1594 = vmax.f32 %v1570, %v1472
          %v1595 = vmax.f32 %v1571, %v1473
          %v1596 = vmin.f32 %v1572, %v1474
          %v1597 = vmin.f32 %v1573, %v1475
          %v1598 = vmax.f32 %v1572, %v1474
          %v1599 = vmax.f32 %v1573, %v1475
          %v1600 = vmin.f32 %v1574, %v1458
          %v1601 = vmin.f32 %v1575, %v1459
          %v1602 = vmax.f32 %v1574, %v1458
          %v1603 = vmax.f32 %v1575, %v1459
          %1604 = vrot.lane.b32.xlu0 %v265, 126
          %v1605 = vpop.permute.xlu0 %1604
          %1606 = vrot.lane.b32.xlu0 %v266, 126
          %v1607 = vpop.permute.xlu0 %1606
          %1608 = vrot.lane.b32.xlu0 %v267, 126
          %v1609 = vpop.permute.xlu0 %1608
          %1610 = vrot.lane.b32.xlu0 %v268, 126
          %v1611 = vpop.permute.xlu0 %1610
          %v1612 = vsel %vm1181, %v1605, %v1607
          %v1613 = vsel %vm1181, %v1609, %v1611
          %v1618 = vmin.f32 %v1159, %v1612
          %v1619 = vmin.f32 %v1165, %v1607
          %v1620 = vmin.f32 %v1160, %v1613
          %v1621 = vmin.f32 %v1166, %v1611
          %v1622 = vmax.f32 %v1159, %v1612
          %v1623 = vmax.f32 %v1165, %v1607
          %v1624 = vmax.f32 %v1160, %v1613
          %v1625 = vmax.f32 %v1166, %v1611
          %v1626 = vmin.f32 %v1161, %v1622
          %v1627 = vmin.f32 %v1167, %v1623
          %v1628 = vmin.f32 %v1162, %v1624
          %v1629 = vmin.f32 %v1168, %v1625
          %v1630 = vmax.f32 %v1161, %v1622
          %v1631 = vmax.f32 %v1167, %v1623
          %v1632 = vmax.f32 %v1162, %v1624
          %v1633 = vmax.f32 %v1168, %v1625
          %1638 = vrot.lane.b32.xlu0 %v1618, 124
          %v1639 = vpop.permute.xlu0 %1638
          %1640 = vrot.lane.b32.xlu0 %v1619, 124
          %v1641 = vpop.permute.xlu0 %1640
          %1642 = vrot.lane.b32.xlu0 %v1620, 124
          %v1643 = vpop.permute.xlu0 %1642
          %1644 = vrot.lane.b32.xlu0 %v1621, 124
          %v1645 = vpop.permute.xlu0 %1644
          %v1646 = vsel %vm1242, %v1639, %v1641
          %v1647 = vsel %vm1242, %v1643, %v1645
          %v1652 = vmin.f32 %v1186, %v1646
          %v1653 = vmin.f32 %v1216, %v1641
          %v1654 = vmin.f32 %v1187, %v1647
          %v1655 = vmin.f32 %v1217, %v1645
          %v1656 = vmax.f32 %v1186, %v1646
          %v1657 = vmax.f32 %v1216, %v1641
          %v1658 = vmax.f32 %v1187, %v1647
          %v1659 = vmax.f32 %v1217, %v1645
          %1664 = vrot.lane.b32.xlu0 %v1630, 124
          %v1665 = vpop.permute.xlu0 %1664
          %1666 = vrot.lane.b32.xlu0 %v1631, 124
          %v1667 = vpop.permute.xlu0 %1666
          %1668 = vrot.lane.b32.xlu0 %v1632, 124
          %v1669 = vpop.permute.xlu0 %1668
          %1670 = vrot.lane.b32.xlu0 %v1633, 124
          %v1671 = vpop.permute.xlu0 %1670
          %v1672 = vsel %vm1242, %v1665, %v1667
          %v1673 = vsel %vm1242, %v1669, %v1671
          %v1678 = vmin.f32 %v1212, %v1672
          %v1679 = vmin.f32 %v1228, %v1667
          %v1680 = vmin.f32 %v1213, %v1673
          %v1681 = vmin.f32 %v1229, %v1671
          %v1682 = vmax.f32 %v1212, %v1672
          %v1683 = vmax.f32 %v1228, %v1667
          %v1684 = vmax.f32 %v1213, %v1673
          %v1685 = vmax.f32 %v1229, %v1671
          %v1686 = vmin.f32 %v1678, %v1656
          %v1687 = vmin.f32 %v1679, %v1657
          %v1688 = vmin.f32 %v1680, %v1658
          %v1689 = vmin.f32 %v1681, %v1659
          %v1690 = vmax.f32 %v1678, %v1656
          %v1691 = vmax.f32 %v1679, %v1657
          %v1692 = vmax.f32 %v1680, %v1658
          %v1693 = vmax.f32 %v1681, %v1659
          %1698 = vrot.lane.b32.xlu0 %v1626, 124
          %v1699 = vpop.permute.xlu0 %1698
          %1700 = vrot.lane.b32.xlu0 %v1627, 124
          %v1701 = vpop.permute.xlu0 %1700
          %1702 = vrot.lane.b32.xlu0 %v1628, 124
          %v1703 = vpop.permute.xlu0 %1702
          %1704 = vrot.lane.b32.xlu0 %v1629, 124
          %v1705 = vpop.permute.xlu0 %1704
          %v1706 = vsel %vm1242, %v1699, %v1701
          %v1707 = vsel %vm1242, %v1703, %v1705
          %v1712 = vmin.f32 %v1210, %v1706
          %v1713 = vmin.f32 %v1226, %v1701
          %v1714 = vmin.f32 %v1211, %v1707
          %v1715 = vmin.f32 %v1227, %v1705
          %v1716 = vmax.f32 %v1210, %v1706
          %v1717 = vmax.f32 %v1226, %v1701
          %v1718 = vmax.f32 %v1211, %v1707
          %v1719 = vmax.f32 %v1227, %v1705
          %v1720 = vmin.f32 %v1208, %v1716
          %v1721 = vmin.f32 %v1224, %v1717
          %v1722 = vmin.f32 %v1209, %v1718
          %v1723 = vmin.f32 %v1225, %v1719
          %v1724 = vmax.f32 %v1208, %v1716
          %v1725 = vmax.f32 %v1224, %v1717
          %v1726 = vmax.f32 %v1209, %v1718
          %v1727 = vmax.f32 %v1225, %v1719
          %v1728 = vmin.f32 %v1712, %v1686
          %v1729 = vmin.f32 %v1713, %v1687
          %v1730 = vmin.f32 %v1714, %v1688
          %v1731 = vmin.f32 %v1715, %v1689
          %v1732 = vmax.f32 %v1712, %v1686
          %v1733 = vmax.f32 %v1713, %v1687
          %v1734 = vmax.f32 %v1714, %v1688
          %v1735 = vmax.f32 %v1715, %v1689
          %v1736 = vmin.f32 %v1720, %v1690
          %v1737 = vmin.f32 %v1721, %v1691
          %v1738 = vmin.f32 %v1722, %v1692
          %v1739 = vmin.f32 %v1723, %v1693
          %v1740 = vmax.f32 %v1720, %v1690
          %v1741 = vmax.f32 %v1721, %v1691
          %v1742 = vmax.f32 %v1722, %v1692
          %v1743 = vmax.f32 %v1723, %v1693
          %v1744 = vmin.f32 %v1724, %v1682
          %v1745 = vmin.f32 %v1725, %v1683
          %v1746 = vmin.f32 %v1726, %v1684
          %v1747 = vmin.f32 %v1727, %v1685
          %v1748 = vmax.f32 %v1724, %v1682
          %v1749 = vmax.f32 %v1725, %v1683
          %v1750 = vmax.f32 %v1726, %v1684
          %v1751 = vmax.f32 %v1727, %v1685
          %1756 = vrot.lane.b32.xlu0 %v1652, 120
          %v1757 = vpop.permute.xlu0 %1756
          %1758 = vrot.lane.b32.xlu0 %v1653, 120
          %v1759 = vpop.permute.xlu0 %1758
          %1760 = vrot.lane.b32.xlu0 %v1654, 120
          %v1761 = vpop.permute.xlu0 %1760
          %1762 = vrot.lane.b32.xlu0 %v1655, 120
          %v1763 = vpop.permute.xlu0 %1762
          %v1764 = vsel %vm1387, %v1757, %v1759
          %v1765 = vsel %vm1387, %v1761, %v1763
          %v1770 = vmin.f32 %v1247, %v1764
          %v1771 = vmin.f32 %v1333, %v1759
          %v1772 = vmin.f32 %v1248, %v1765
          %v1773 = vmin.f32 %v1334, %v1763
          %v1774 = vmax.f32 %v1247, %v1764
          %v1775 = vmax.f32 %v1333, %v1759
          %v1776 = vmax.f32 %v1248, %v1765
          %v1777 = vmax.f32 %v1334, %v1763
          %1782 = vrot.lane.b32.xlu0 %v1740, 120
          %v1783 = vpop.permute.xlu0 %1782
          %1784 = vrot.lane.b32.xlu0 %v1741, 120
          %v1785 = vpop.permute.xlu0 %1784
          %1786 = vrot.lane.b32.xlu0 %v1742, 120
          %v1787 = vpop.permute.xlu0 %1786
          %1788 = vrot.lane.b32.xlu0 %v1743, 120
          %v1789 = vpop.permute.xlu0 %1788
          %v1790 = vsel %vm1387, %v1783, %v1785
          %v1791 = vsel %vm1387, %v1787, %v1789
          %v1796 = vmin.f32 %v1325, %v1790
          %v1797 = vmin.f32 %v1369, %v1785
          %v1798 = vmin.f32 %v1326, %v1791
          %v1799 = vmin.f32 %v1370, %v1789
          %v1800 = vmax.f32 %v1325, %v1790
          %v1801 = vmax.f32 %v1369, %v1785
          %v1802 = vmax.f32 %v1326, %v1791
          %v1803 = vmax.f32 %v1370, %v1789
          %v1804 = vmin.f32 %v1796, %v1774
          %v1805 = vmin.f32 %v1797, %v1775
          %v1806 = vmin.f32 %v1798, %v1776
          %v1807 = vmin.f32 %v1799, %v1777
          %v1808 = vmax.f32 %v1796, %v1774
          %v1809 = vmax.f32 %v1797, %v1775
          %v1810 = vmax.f32 %v1798, %v1776
          %v1811 = vmax.f32 %v1799, %v1777
          %1816 = vrot.lane.b32.xlu0 %v1732, 120
          %v1817 = vpop.permute.xlu0 %1816
          %1818 = vrot.lane.b32.xlu0 %v1733, 120
          %v1819 = vpop.permute.xlu0 %1818
          %1820 = vrot.lane.b32.xlu0 %v1734, 120
          %v1821 = vpop.permute.xlu0 %1820
          %1822 = vrot.lane.b32.xlu0 %v1735, 120
          %v1823 = vpop.permute.xlu0 %1822
          %v1824 = vsel %vm1387, %v1817, %v1819
          %v1825 = vsel %vm1387, %v1821, %v1823
          %v1830 = vmin.f32 %v1321, %v1824
          %v1831 = vmin.f32 %v1365, %v1819
          %v1832 = vmin.f32 %v1322, %v1825
          %v1833 = vmin.f32 %v1366, %v1823
          %v1834 = vmax.f32 %v1321, %v1824
          %v1835 = vmax.f32 %v1365, %v1819
          %v1836 = vmax.f32 %v1322, %v1825
          %v1837 = vmax.f32 %v1366, %v1823
          %1842 = vrot.lane.b32.xlu0 %v1748, 120
          %v1843 = vpop.permute.xlu0 %1842
          %1844 = vrot.lane.b32.xlu0 %v1749, 120
          %v1845 = vpop.permute.xlu0 %1844
          %1846 = vrot.lane.b32.xlu0 %v1750, 120
          %v1847 = vpop.permute.xlu0 %1846
          %1848 = vrot.lane.b32.xlu0 %v1751, 120
          %v1849 = vpop.permute.xlu0 %1848
          %v1850 = vsel %vm1387, %v1843, %v1845
          %v1851 = vsel %vm1387, %v1847, %v1849
          %v1856 = vmin.f32 %v1329, %v1850
          %v1857 = vmin.f32 %v1373, %v1845
          %v1858 = vmin.f32 %v1330, %v1851
          %v1859 = vmin.f32 %v1374, %v1849
          %v1860 = vmax.f32 %v1329, %v1850
          %v1861 = vmax.f32 %v1373, %v1845
          %v1862 = vmax.f32 %v1330, %v1851
          %v1863 = vmax.f32 %v1374, %v1849
          %v1864 = vmin.f32 %v1856, %v1834
          %v1865 = vmin.f32 %v1857, %v1835
          %v1866 = vmin.f32 %v1858, %v1836
          %v1867 = vmin.f32 %v1859, %v1837
          %v1868 = vmax.f32 %v1856, %v1834
          %v1869 = vmax.f32 %v1857, %v1835
          %v1870 = vmax.f32 %v1858, %v1836
          %v1871 = vmax.f32 %v1859, %v1837
          %v1872 = vmin.f32 %v1830, %v1804
          %v1873 = vmin.f32 %v1831, %v1805
          %v1874 = vmin.f32 %v1832, %v1806
          %v1875 = vmin.f32 %v1833, %v1807
          %v1876 = vmax.f32 %v1830, %v1804
          %v1877 = vmax.f32 %v1831, %v1805
          %v1878 = vmax.f32 %v1832, %v1806
          %v1879 = vmax.f32 %v1833, %v1807
          %v1880 = vmin.f32 %v1864, %v1808
          %v1881 = vmin.f32 %v1865, %v1809
          %v1882 = vmin.f32 %v1866, %v1810
          %v1883 = vmin.f32 %v1867, %v1811
          %v1884 = vmax.f32 %v1864, %v1808
          %v1885 = vmax.f32 %v1865, %v1809
          %v1886 = vmax.f32 %v1866, %v1810
          %v1887 = vmax.f32 %v1867, %v1811
          %v1888 = vmin.f32 %v1868, %v1800
          %v1889 = vmin.f32 %v1869, %v1801
          %v1890 = vmin.f32 %v1870, %v1802
          %v1891 = vmin.f32 %v1871, %v1803
          %v1892 = vmax.f32 %v1868, %v1800
          %v1893 = vmax.f32 %v1869, %v1801
          %v1894 = vmax.f32 %v1870, %v1802
          %v1895 = vmax.f32 %v1871, %v1803
          %1900 = vrot.lane.b32.xlu0 %v1728, 120
          %v1901 = vpop.permute.xlu0 %1900
          %1902 = vrot.lane.b32.xlu0 %v1729, 120
          %v1903 = vpop.permute.xlu0 %1902
          %1904 = vrot.lane.b32.xlu0 %v1730, 120
          %v1905 = vpop.permute.xlu0 %1904
          %1906 = vrot.lane.b32.xlu0 %v1731, 120
          %v1907 = vpop.permute.xlu0 %1906
          %v1908 = vsel %vm1387, %v1901, %v1903
          %v1909 = vsel %vm1387, %v1905, %v1907
          %v1914 = vmin.f32 %v1319, %v1908
          %v1915 = vmin.f32 %v1363, %v1903
          %v1916 = vmin.f32 %v1320, %v1909
          %v1917 = vmin.f32 %v1364, %v1907
          %v1918 = vmax.f32 %v1319, %v1908
          %v1919 = vmax.f32 %v1363, %v1903
          %v1920 = vmax.f32 %v1320, %v1909
          %v1921 = vmax.f32 %v1364, %v1907
          %1926 = vrot.lane.b32.xlu0 %v1744, 120
          %v1927 = vpop.permute.xlu0 %1926
          %1928 = vrot.lane.b32.xlu0 %v1745, 120
          %v1929 = vpop.permute.xlu0 %1928
          %1930 = vrot.lane.b32.xlu0 %v1746, 120
          %v1931 = vpop.permute.xlu0 %1930
          %1932 = vrot.lane.b32.xlu0 %v1747, 120
          %v1933 = vpop.permute.xlu0 %1932
          %v1934 = vsel %vm1387, %v1927, %v1929
          %v1935 = vsel %vm1387, %v1931, %v1933
          %v1940 = vmin.f32 %v1327, %v1934
          %v1941 = vmin.f32 %v1371, %v1929
          %v1942 = vmin.f32 %v1328, %v1935
          %v1943 = vmin.f32 %v1372, %v1933
          %v1944 = vmax.f32 %v1327, %v1934
          %v1945 = vmax.f32 %v1371, %v1929
          %v1946 = vmax.f32 %v1328, %v1935
          %v1947 = vmax.f32 %v1372, %v1933
          %v1948 = vmin.f32 %v1940, %v1918
          %v1949 = vmin.f32 %v1941, %v1919
          %v1950 = vmin.f32 %v1942, %v1920
          %v1951 = vmin.f32 %v1943, %v1921
          %v1952 = vmax.f32 %v1940, %v1918
          %v1953 = vmax.f32 %v1941, %v1919
          %v1954 = vmax.f32 %v1942, %v1920
          %v1955 = vmax.f32 %v1943, %v1921
          %1960 = vrot.lane.b32.xlu0 %v1736, 120
          %v1961 = vpop.permute.xlu0 %1960
          %1962 = vrot.lane.b32.xlu0 %v1737, 120
          %v1963 = vpop.permute.xlu0 %1962
          %1964 = vrot.lane.b32.xlu0 %v1738, 120
          %v1965 = vpop.permute.xlu0 %1964
          %1966 = vrot.lane.b32.xlu0 %v1739, 120
          %v1967 = vpop.permute.xlu0 %1966
          %v1968 = vsel %vm1387, %v1961, %v1963
          %v1969 = vsel %vm1387, %v1965, %v1967
          %v1974 = vmin.f32 %v1323, %v1968
          %v1975 = vmin.f32 %v1367, %v1963
          %v1976 = vmin.f32 %v1324, %v1969
          %v1977 = vmin.f32 %v1368, %v1967
          %v1978 = vmax.f32 %v1323, %v1968
          %v1979 = vmax.f32 %v1367, %v1963
          %v1980 = vmax.f32 %v1324, %v1969
          %v1981 = vmax.f32 %v1368, %v1967
          %v1982 = vmin.f32 %v1313, %v1978
          %v1983 = vmin.f32 %v1357, %v1979
          %v1984 = vmin.f32 %v1314, %v1980
          %v1985 = vmin.f32 %v1358, %v1981
          %v1986 = vmax.f32 %v1313, %v1978
          %v1987 = vmax.f32 %v1357, %v1979
          %v1988 = vmax.f32 %v1314, %v1980
          %v1989 = vmax.f32 %v1358, %v1981
          %v1990 = vmin.f32 %v1974, %v1948
          %v1991 = vmin.f32 %v1975, %v1949
          %v1992 = vmin.f32 %v1976, %v1950
          %v1993 = vmin.f32 %v1977, %v1951
          %v1994 = vmax.f32 %v1974, %v1948
          %v1995 = vmax.f32 %v1975, %v1949
          %v1996 = vmax.f32 %v1976, %v1950
          %v1997 = vmax.f32 %v1977, %v1951
          %v1998 = vmin.f32 %v1982, %v1952
          %v1999 = vmin.f32 %v1983, %v1953
          %v2000 = vmin.f32 %v1984, %v1954
          %v2001 = vmin.f32 %v1985, %v1955
          %v2002 = vmax.f32 %v1982, %v1952
          %v2003 = vmax.f32 %v1983, %v1953
          %v2004 = vmax.f32 %v1984, %v1954
          %v2005 = vmax.f32 %v1985, %v1955
          %v2006 = vmin.f32 %v1986, %v1944
          %v2007 = vmin.f32 %v1987, %v1945
          %v2008 = vmin.f32 %v1988, %v1946
          %v2009 = vmin.f32 %v1989, %v1947
          %v2010 = vmax.f32 %v1986, %v1944
          %v2011 = vmax.f32 %v1987, %v1945
          %v2012 = vmax.f32 %v1988, %v1946
          %v2013 = vmax.f32 %v1989, %v1947
          %v2014 = vmin.f32 %v1914, %v1872
          %v2015 = vmin.f32 %v1915, %v1873
          %v2016 = vmin.f32 %v1916, %v1874
          %v2017 = vmin.f32 %v1917, %v1875
          %v2018 = vmax.f32 %v1914, %v1872
          %v2019 = vmax.f32 %v1915, %v1873
          %v2020 = vmax.f32 %v1916, %v1874
          %v2021 = vmax.f32 %v1917, %v1875
          %v2022 = vmin.f32 %v1990, %v1876
          %v2023 = vmin.f32 %v1991, %v1877
          %v2024 = vmin.f32 %v1992, %v1878
          %v2025 = vmin.f32 %v1993, %v1879
          %v2026 = vmax.f32 %v1990, %v1876
          %v2027 = vmax.f32 %v1991, %v1877
          %v2028 = vmax.f32 %v1992, %v1878
          %v2029 = vmax.f32 %v1993, %v1879
          %v2030 = vmin.f32 %v1994, %v1880
          %v2031 = vmin.f32 %v1995, %v1881
          %v2032 = vmin.f32 %v1996, %v1882
          %v2033 = vmin.f32 %v1997, %v1883
          %v2034 = vmax.f32 %v1994, %v1880
          %v2035 = vmax.f32 %v1995, %v1881
          %v2036 = vmax.f32 %v1996, %v1882
          %v2037 = vmax.f32 %v1997, %v1883
          %v2038 = vmin.f32 %v1998, %v1884
          %v2039 = vmin.f32 %v1999, %v1885
          %v2040 = vmin.f32 %v2000, %v1886
          %v2041 = vmin.f32 %v2001, %v1887
          %v2042 = vmax.f32 %v1998, %v1884
          %v2043 = vmax.f32 %v1999, %v1885
          %v2044 = vmax.f32 %v2000, %v1886
          %v2045 = vmax.f32 %v2001, %v1887
          %v2046 = vmin.f32 %v2002, %v1888
          %v2047 = vmin.f32 %v2003, %v1889
          %v2048 = vmin.f32 %v2004, %v1890
          %v2049 = vmin.f32 %v2005, %v1891
          %v2050 = vmax.f32 %v2002, %v1888
          %v2051 = vmax.f32 %v2003, %v1889
          %v2052 = vmax.f32 %v2004, %v1890
          %v2053 = vmax.f32 %v2005, %v1891
          %v2054 = vmin.f32 %v2006, %v1892
          %v2055 = vmin.f32 %v2007, %v1893
          %v2056 = vmin.f32 %v2008, %v1894
          %v2057 = vmin.f32 %v2009, %v1895
          %v2058 = vmax.f32 %v2006, %v1892
          %v2059 = vmax.f32 %v2007, %v1893
          %v2060 = vmax.f32 %v2008, %v1894
          %v2061 = vmax.f32 %v2009, %v1895
          %v2062 = vmin.f32 %v2010, %v1860
          %v2063 = vmin.f32 %v2011, %v1861
          %v2064 = vmin.f32 %v2012, %v1862
          %v2065 = vmin.f32 %v2013, %v1863
          %v2066 = vmax.f32 %v2010, %v1860
          %v2067 = vmax.f32 %v2011, %v1861
          %v2068 = vmax.f32 %v2012, %v1862
          %v2069 = vmax.f32 %v2013, %v1863
          %2074 = vrot.lane.b32.xlu0 %v1770, 112
          %v2075 = vpop.permute.xlu0 %2074
          %2076 = vrot.lane.b32.xlu0 %v1771, 112
          %v2077 = vpop.permute.xlu0 %2076
          %2078 = vrot.lane.b32.xlu0 %v1772, 112
          %v2079 = vpop.permute.xlu0 %2078
          %2080 = vrot.lane.b32.xlu0 %v1773, 112
          %v2081 = vpop.permute.xlu0 %2080
          %vm2082 = vcmask 916480
          %v2083 = vsel %vm2082, %v2075, %v2077
          %v2084 = vsel %vm2082, %v2079, %v2081
          %v2087 = vmax.f32 %v1392, %v2083
          %v2088 = vmax.f32 %v1393, %v2084
          %2093 = vrot.lane.b32.xlu0 %v2042, 112
          %v2094 = vpop.permute.xlu0 %2093
          %2095 = vrot.lane.b32.xlu0 %v2043, 112
          %v2096 = vpop.permute.xlu0 %2095
          %2097 = vrot.lane.b32.xlu0 %v2044, 112
          %v2098 = vpop.permute.xlu0 %2097
          %2099 = vrot.lane.b32.xlu0 %v2045, 112
          %v2100 = vpop.permute.xlu0 %2099
          %v2101 = vsel %vm2082, %v2094, %v2096
          %v2102 = vsel %vm2082, %v2098, %v2100
          %v2105 = vmin.f32 %v1590, %v2101
          %v2106 = vmin.f32 %v1591, %v2102
          %v2107 = vmax.f32 %v2105, %v2087
          %v2108 = vmax.f32 %v2106, %v2088
          %2113 = vrot.lane.b32.xlu0 %v2026, 112
          %v2114 = vpop.permute.xlu0 %2113
          %2115 = vrot.lane.b32.xlu0 %v2027, 112
          %v2116 = vpop.permute.xlu0 %2115
          %2117 = vrot.lane.b32.xlu0 %v2028, 112
          %v2118 = vpop.permute.xlu0 %2117
          %2119 = vrot.lane.b32.xlu0 %v2029, 112
          %v2120 = vpop.permute.xlu0 %2119
          %v2121 = vsel %vm2082, %v2114, %v2116
          %v2122 = vsel %vm2082, %v2118, %v2120
          %v2125 = vmax.f32 %v1582, %v2121
          %v2126 = vmax.f32 %v1583, %v2122
          %2131 = vrot.lane.b32.xlu0 %v2058, 112
          %v2132 = vpop.permute.xlu0 %2131
          %2133 = vrot.lane.b32.xlu0 %v2059, 112
          %v2134 = vpop.permute.xlu0 %2133
          %2135 = vrot.lane.b32.xlu0 %v2060, 112
          %v2136 = vpop.permute.xlu0 %2135
          %2137 = vrot.lane.b32.xlu0 %v2061, 112
          %v2138 = vpop.permute.xlu0 %2137
          %v2139 = vsel %vm2082, %v2132, %v2134
          %v2140 = vsel %vm2082, %v2136, %v2138
          %v2143 = vmin.f32 %v1598, %v2139
          %v2144 = vmin.f32 %v1599, %v2140
          %v2145 = vmin.f32 %v2143, %v2125
          %v2146 = vmin.f32 %v2144, %v2126
          %v2147 = vmax.f32 %v2145, %v2107
          %v2148 = vmax.f32 %v2146, %v2108
          %2153 = vrot.lane.b32.xlu0 %v2018, 112
          %v2154 = vpop.permute.xlu0 %2153
          %2155 = vrot.lane.b32.xlu0 %v2019, 112
          %v2156 = vpop.permute.xlu0 %2155
          %2157 = vrot.lane.b32.xlu0 %v2020, 112
          %v2158 = vpop.permute.xlu0 %2157
          %2159 = vrot.lane.b32.xlu0 %v2021, 112
          %v2160 = vpop.permute.xlu0 %2159
          %v2161 = vsel %vm2082, %v2154, %v2156
          %v2162 = vsel %vm2082, %v2158, %v2160
          %v2165 = vmax.f32 %v1578, %v2161
          %v2166 = vmax.f32 %v1579, %v2162
          %2171 = vrot.lane.b32.xlu0 %v2050, 112
          %v2172 = vpop.permute.xlu0 %2171
          %2173 = vrot.lane.b32.xlu0 %v2051, 112
          %v2174 = vpop.permute.xlu0 %2173
          %2175 = vrot.lane.b32.xlu0 %v2052, 112
          %v2176 = vpop.permute.xlu0 %2175
          %2177 = vrot.lane.b32.xlu0 %v2053, 112
          %v2178 = vpop.permute.xlu0 %2177
          %v2179 = vsel %vm2082, %v2172, %v2174
          %v2180 = vsel %vm2082, %v2176, %v2178
          %v2183 = vmin.f32 %v1594, %v2179
          %v2184 = vmin.f32 %v1595, %v2180
          %v2185 = vmax.f32 %v2183, %v2165
          %v2186 = vmax.f32 %v2184, %v2166
          %2191 = vrot.lane.b32.xlu0 %v2034, 112
          %v2192 = vpop.permute.xlu0 %2191
          %2193 = vrot.lane.b32.xlu0 %v2035, 112
          %v2194 = vpop.permute.xlu0 %2193
          %2195 = vrot.lane.b32.xlu0 %v2036, 112
          %v2196 = vpop.permute.xlu0 %2195
          %2197 = vrot.lane.b32.xlu0 %v2037, 112
          %v2198 = vpop.permute.xlu0 %2197
          %v2199 = vsel %vm2082, %v2192, %v2194
          %v2200 = vsel %vm2082, %v2196, %v2198
          %v2203 = vmax.f32 %v1586, %v2199
          %v2204 = vmax.f32 %v1587, %v2200
          %2209 = vrot.lane.b32.xlu0 %v2066, 112
          %v2210 = vpop.permute.xlu0 %2209
          %2211 = vrot.lane.b32.xlu0 %v2067, 112
          %v2212 = vpop.permute.xlu0 %2211
          %2213 = vrot.lane.b32.xlu0 %v2068, 112
          %v2214 = vpop.permute.xlu0 %2213
          %2215 = vrot.lane.b32.xlu0 %v2069, 112
          %v2216 = vpop.permute.xlu0 %2215
          %v2217 = vsel %vm2082, %v2210, %v2212
          %v2218 = vsel %vm2082, %v2214, %v2216
          %v2221 = vmin.f32 %v1602, %v2217
          %v2222 = vmin.f32 %v1603, %v2218
          %v2223 = vmin.f32 %v2221, %v2203
          %v2224 = vmin.f32 %v2222, %v2204
          %v2225 = vmin.f32 %v2223, %v2185
          %v2226 = vmin.f32 %v2224, %v2186
          %v2227 = vmax.f32 %v2225, %v2147
          %v2228 = vmax.f32 %v2226, %v2148
          %2233 = vrot.lane.b32.xlu0 %v2014, 112
          %v2234 = vpop.permute.xlu0 %2233
          %2235 = vrot.lane.b32.xlu0 %v2015, 112
          %v2236 = vpop.permute.xlu0 %2235
          %2237 = vrot.lane.b32.xlu0 %v2016, 112
          %v2238 = vpop.permute.xlu0 %2237
          %2239 = vrot.lane.b32.xlu0 %v2017, 112
          %v2240 = vpop.permute.xlu0 %2239
          %v2241 = vsel %vm2082, %v2234, %v2236
          %v2242 = vsel %vm2082, %v2238, %v2240
          %v2245 = vmax.f32 %v1576, %v2241
          %v2246 = vmax.f32 %v1577, %v2242
          %2251 = vrot.lane.b32.xlu0 %v2046, 112
          %v2252 = vpop.permute.xlu0 %2251
          %2253 = vrot.lane.b32.xlu0 %v2047, 112
          %v2254 = vpop.permute.xlu0 %2253
          %2255 = vrot.lane.b32.xlu0 %v2048, 112
          %v2256 = vpop.permute.xlu0 %2255
          %2257 = vrot.lane.b32.xlu0 %v2049, 112
          %v2258 = vpop.permute.xlu0 %2257
          %v2259 = vsel %vm2082, %v2252, %v2254
          %v2260 = vsel %vm2082, %v2256, %v2258
          %v2263 = vmin.f32 %v1592, %v2259
          %v2264 = vmin.f32 %v1593, %v2260
          %v2265 = vmax.f32 %v2263, %v2245
          %v2266 = vmax.f32 %v2264, %v2246
          %2271 = vrot.lane.b32.xlu0 %v2030, 112
          %v2272 = vpop.permute.xlu0 %2271
          %2273 = vrot.lane.b32.xlu0 %v2031, 112
          %v2274 = vpop.permute.xlu0 %2273
          %2275 = vrot.lane.b32.xlu0 %v2032, 112
          %v2276 = vpop.permute.xlu0 %2275
          %2277 = vrot.lane.b32.xlu0 %v2033, 112
          %v2278 = vpop.permute.xlu0 %2277
          %v2279 = vsel %vm2082, %v2272, %v2274
          %v2280 = vsel %vm2082, %v2276, %v2278
          %v2283 = vmax.f32 %v1584, %v2279
          %v2284 = vmax.f32 %v1585, %v2280
          %2289 = vrot.lane.b32.xlu0 %v2062, 112
          %v2290 = vpop.permute.xlu0 %2289
          %2291 = vrot.lane.b32.xlu0 %v2063, 112
          %v2292 = vpop.permute.xlu0 %2291
          %2293 = vrot.lane.b32.xlu0 %v2064, 112
          %v2294 = vpop.permute.xlu0 %2293
          %2295 = vrot.lane.b32.xlu0 %v2065, 112
          %v2296 = vpop.permute.xlu0 %2295
          %v2297 = vsel %vm2082, %v2290, %v2292
          %v2298 = vsel %vm2082, %v2294, %v2296
          %v2301 = vmin.f32 %v1600, %v2297
          %v2302 = vmin.f32 %v1601, %v2298
          %v2303 = vmin.f32 %v2301, %v2283
          %v2304 = vmin.f32 %v2302, %v2284
          %v2305 = vmax.f32 %v2303, %v2265
          %v2306 = vmax.f32 %v2304, %v2266
          %2311 = vrot.lane.b32.xlu0 %v2022, 112
          %v2312 = vpop.permute.xlu0 %2311
          %2313 = vrot.lane.b32.xlu0 %v2023, 112
          %v2314 = vpop.permute.xlu0 %2313
          %2315 = vrot.lane.b32.xlu0 %v2024, 112
          %v2316 = vpop.permute.xlu0 %2315
          %2317 = vrot.lane.b32.xlu0 %v2025, 112
          %v2318 = vpop.permute.xlu0 %2317
          %v2319 = vsel %vm2082, %v2312, %v2314
          %v2320 = vsel %vm2082, %v2316, %v2318
          %v2323 = vmax.f32 %v1580, %v2319
          %v2324 = vmax.f32 %v1581, %v2320
          %2329 = vrot.lane.b32.xlu0 %v2054, 112
          %v2330 = vpop.permute.xlu0 %2329
          %2331 = vrot.lane.b32.xlu0 %v2055, 112
          %v2332 = vpop.permute.xlu0 %2331
          %2333 = vrot.lane.b32.xlu0 %v2056, 112
          %v2334 = vpop.permute.xlu0 %2333
          %2335 = vrot.lane.b32.xlu0 %v2057, 112
          %v2336 = vpop.permute.xlu0 %2335
          %v2337 = vsel %vm2082, %v2330, %v2332
          %v2338 = vsel %vm2082, %v2334, %v2336
          %v2341 = vmin.f32 %v1596, %v2337
          %v2342 = vmin.f32 %v1597, %v2338
          %v2343 = vmax.f32 %v2341, %v2323
          %v2344 = vmax.f32 %v2342, %v2324
          %2349 = vrot.lane.b32.xlu0 %v2038, 112
          %v2350 = vpop.permute.xlu0 %2349
          %2351 = vrot.lane.b32.xlu0 %v2039, 112
          %v2352 = vpop.permute.xlu0 %2351
          %2353 = vrot.lane.b32.xlu0 %v2040, 112
          %v2354 = vpop.permute.xlu0 %2353
          %2355 = vrot.lane.b32.xlu0 %v2041, 112
          %v2356 = vpop.permute.xlu0 %2355
          %v2357 = vsel %vm2082, %v2350, %v2352
          %v2358 = vsel %vm2082, %v2354, %v2356
          %v2361 = vmax.f32 %v1588, %v2357
          %v2362 = vmax.f32 %v1589, %v2358
          %v2363 = vmin.f32 %v1558, %v2361
          %v2364 = vmin.f32 %v1559, %v2362
          %v2365 = vmin.f32 %v2363, %v2343
          %v2366 = vmin.f32 %v2364, %v2344
          %v2367 = vmin.f32 %v2365, %v2305
          %v2368 = vmin.f32 %v2366, %v2306
          %v2369 = vmin.f32 %v2367, %v2227
          %v2370 = vmin.f32 %v2368, %v2228
          %v2371 = vmul.f32 %v1144, %v1144
          %v2372 = vmul.f32 %v1145, %v1145
          %v2373 = vmul.f32 %v2369, %v2369
          %v2374 = vmul.f32 %v2370, %v2370
          %v2377 = vrot.slane %v2371, 1
          %v2378 = vrot.slane %v2372, 1
          %2379 = vrot.lane.b32.xlu0 %v2377, 113
          %v2380 = vpop.permute.xlu0 %2379
          %2381 = vrot.lane.b32.xlu0 %v2378, 113
          %v2382 = vpop.permute.xlu0 %2381
          %vm2383 = vcmask 924672
          %v2384 = vsel %vm2383, %v2380, %v2382
          %v2386 = vadd.f32 %v2373, %v2384
          %v2387 = vadd.f32 %v2374, %v2384
          %v2388 = vadd.f32 %v2386, 1e-06
          %v2389 = vadd.f32 %v2387, 1e-06
          %v2390 = vrcp.pop %v2388
          %v2391 = vrcp.pop %v2389
          %v2392 = vmul.f32 %v2388, %v2390
          %v2393 = vmul.f32 %v2389, %v2391
          %v2394 = vsub.f32 2.0, %v2392
          %v2395 = vsub.f32 2.0, %v2393
          %v2396 = vmul.f32 %v2390, %v2394
          %v2397 = vmul.f32 %v2391, %v2395
          %v2398 = vadd.f32 %v2373, 1e-06
          %v2399 = vadd.f32 %v2374, 1e-06
          %v2400 = vmul.f32 %v2398, %v2396
          %v2401 = vmul.f32 %v2399, %v2397
          %v2402 = vadd.f32 %v2371, 1e-06
          %v2403 = vadd.f32 %v2372, 1e-06
          %vm2406 = vcmask 1040384
          %v2407 = vrot.slane %v2396, 7
          %v2408 = vrot.slane %v2397, 7
          %v2409 = vsel %vm2406, %v2407, %v2408
          %2410 = vrot.lane.b32.xlu0 %v2409, 15
          %v2411 = vpop.permute.xlu0 %2410
          %v2413 = vmul.f32 %v2402, %v2411
          %v2414 = vmul.f32 %v2403, %v2411
          %s2415 = scalar_lea.vmem %s159, %s257 [#allocation8]
          %2416 = vst [vmem:[%s2415 - $0x7] sm:$0x80] %v2400
          %2417 = vst [vmem:[%s2415 + $0x1] sm:$0x7f] %v2401
          %2420 = vrot.lane.b32.xlu0 %v2413, 113
          %v2421 = vpop.permute.xlu0 %2420
          %2422 = vrot.lane.b32.xlu0 %v2414, 113
          %v2423 = vpop.permute.xlu0 %2422
          %v2424 = vsel %vm2383, %v2421, %v2423
          %s2426 = scalar_lea.vmem %s166, %s257 [#allocation9]
          %2427 = vst [vmem:[%s2426] sm:$0xff] %v2424
          %2430 = vrot.lane.b32.xlu0 %v2400, 15
          %v2431 = vpop.permute.xlu0 %2430
          %2432 = vrot.lane.b32.xlu0 %v2401, 15
          %v2433 = vpop.permute.xlu0 %2432
          %v2436 = vmul.f32 %v265, %v2431
          %v2437 = vmul.f32 %v266, %v2431
          %v2438 = vmul.f32 %v267, %v2433
          %v2439 = vmul.f32 %v268, %v2433
          %2444 = vrot.lane.b32.xlu0 %v2436, 113
          %v2445 = vpop.permute.xlu0 %2444
          %2446 = vrot.lane.b32.xlu0 %v2437, 113
          %v2447 = vpop.permute.xlu0 %2446
          %2448 = vrot.lane.b32.xlu0 %v2438, 113
          %v2449 = vpop.permute.xlu0 %2448
          %2450 = vrot.lane.b32.xlu0 %v2439, 113
          %v2451 = vpop.permute.xlu0 %2450
          %v2452 = vsel %vm2383, %v2445, %v2447
          %v2453 = vsel %vm2383, %v2449, %v2451
          %s2456 = scalar_lea.vmem %s145, %s257 [#allocation4]
          %2457 = vst [vmem:[%s2456 - $0x7] sm:$0x80] %v2452
          %2458 = vst [vmem:[%s2456 + $0x1] sm:$0x7f] %v2453
          %v2459 = vrot.slane %v2413, 1
          %v2460 = vrot.slane %v2414, 1
          %v2463 = vmul.f32 %v265, %v2459
          %v2464 = vmul.f32 %v266, %v2460
          %v2465 = vmul.f32 %v267, %v2459
          %v2466 = vmul.f32 %v268, %v2460
          %2471 = vrot.lane.b32.xlu0 %v2463, 113
          %v2472 = vpop.permute.xlu0 %2471
          %2473 = vrot.lane.b32.xlu0 %v2464, 113
          %v2474 = vpop.permute.xlu0 %2473
          %2475 = vrot.lane.b32.xlu0 %v2465, 113
          %v2476 = vpop.permute.xlu0 %2475
          %2477 = vrot.lane.b32.xlu0 %v2466, 113
          %v2478 = vpop.permute.xlu0 %2477
          %v2479 = vsel %vm2383, %v2472, %v2474
          %v2480 = vsel %vm2383, %v2476, %v2478
          %s2483 = scalar_lea.vmem %s152, %s257 [#allocation6]
          %2484 = vst [vmem:[%s2483 - $0x7] sm:$0x80] %v2479
          %2485 = vst [vmem:[%s2483 + $0x1] sm:$0x7f] %v2480
        $region51: #{a_call__.1} parent=11 // loop_footer
          %s256 = sadd.s32 1, %s252
        $region52: #{a_call__.1} parent=11 // loop_footer_branch
          %251 = sbr.rel target = $region48
        $region53: #{a_call__.1} parent=11 // loop_exit
          _
        %s2486 = sand.u32 %s49, 1
        %s2487 = scalar_lea.sflag [#allocation5], %s2486
        %s2488 = sand.u32 %s49, 1
        %s2489 = smul.addr %s2488, 16
        %s2490 = scalar_lea.vmem [#allocation4], %s2489
        %s2491 = sand.u32 %s20, 1
        %s2492 = scalar_lea.sflag [#allocation7], %s2491
        %s2493 = sand.u32 %s72, 1
        %s2494 = smul.addr %s2493, 16
        %s2495 = scalar_lea.vmem [#allocation6], %s2494
        %s2496 = sand.u32 %s20, 1
        %s2497 = scalar_lea.sflag [#allocation7], %s2496
        %s2498 = sand.u32 %s95, 1
        %s2499 = smul.addr %s2498, 16
        %s2500 = scalar_lea.vmem [#allocation8], %s2499
        %s2501 = sand.u32 %s118, 1
        %s2502 = scalar_lea.sflag [#allocation10], %s2501
        %s2503 = sand.u32 %s118, 1
        %s2504 = smul.addr %s2503, 16
        %s2505 = scalar_lea.vmem [#allocation9], %s2504
        // Predicated region
        $region54: #{a_call__.1} parent=11 // pred_check
          %p2506 = pneg %p55
        $region55: #{a_call__.1} parent=11 // pred_check_branch
          %2508 = sbr.rel (%p2506) target = $region57
        $region56: #{a_call__.1} parent=11 // pred_region
          %s2509 = smul.u32 2, %s27
          %s2511 = ssub.s32 256, 256
          %2512 = vsyncadd %s2487, %s2511
          %s2513 = sadd.s32 %s28, %s2509
          %s2514 = smul.addr %s26, 2
          %s2515 = sadd.s32 %s2513, %s2514
          %s2516 = smul.addr %s2515, 128
          %s2517 = scalar_lea.hbm %s1, %s2516
          %s2518 = sshll.u32 %s2490, 4
          %s2519 = int_to_ptr.vmem [resolvable:$true] %s2518
          %2524 = dma.vmem_to_hbm [thread:$0]  %s2519, 256, %s2517, %s2487, 128, 128, 8
        $region57: #{a_call__.1} parent=11 // pred_fallthru
          _
        // Predicated region
        $region58: #{a_call__.1} parent=11 // pred_check
          %p2525 = pneg %p78
        $region59: #{a_call__.1} parent=11 // pred_check_branch
          %2527 = sbr.rel (%p2525) target = $region61
        $region60: #{a_call__.1} parent=11 // pred_region
          %s2528 = smul.u32 2, %s27
          %s2530 = ssub.s32 256, 256
          %2531 = vsyncadd %s2492, %s2530
          %s2532 = sadd.s32 %s28, %s2528
          %s2533 = smul.addr %s26, 2
          %s2534 = sadd.s32 %s2532, %s2533
          %s2535 = smul.addr %s2534, 128
          %s2536 = scalar_lea.hbm %s2, %s2535
          %s2537 = sshll.u32 %s2495, 4
          %s2538 = int_to_ptr.vmem [resolvable:$true] %s2537
          %2543 = dma.vmem_to_hbm [thread:$0]  %s2538, 256, %s2536, %s2492, 128, 128, 8
        $region61: #{a_call__.1} parent=11 // pred_fallthru
          _
        // Predicated region
        $region62: #{a_call__.1} parent=11 // pred_check
          %p2544 = pneg %p101
        $region63: #{a_call__.1} parent=11 // pred_check_branch
          %2546 = sbr.rel (%p2544) target = $region65
        $region64: #{a_call__.1} parent=11 // pred_region
          %s2547 = smul.u32 2, %s27
          %s2549 = ssub.s32 256, 256
          %2550 = vsyncadd %s2497, %s2549
          %s2551 = sadd.s32 %s28, %s2547
          %s2552 = smul.addr %s26, 2
          %s2553 = sadd.s32 %s2551, %s2552
          %s2554 = smul.addr %s2553, 128
          %s2555 = scalar_lea.hbm %s3, %s2554
          %s2556 = sshll.u32 %s2500, 4
          %s2557 = int_to_ptr.vmem [resolvable:$true] %s2556
          %2562 = dma.vmem_to_hbm [thread:$0]  %s2557, 256, %s2555, %s2497, 128, 128, 8
        $region65: #{a_call__.1} parent=11 // pred_fallthru
          _
        // Predicated region
        $region66: #{a_call__.1} parent=11 // pred_check
          %p2563 = pneg %p124
        $region67: #{a_call__.1} parent=11 // pred_check_branch
          %2565 = sbr.rel (%p2563) target = $region69
        $region68: #{a_call__.1} parent=11 // pred_region
          %s2566 = smul.u32 2, %s27
          %s2568 = ssub.s32 256, 256
          %2569 = vsyncadd %s2502, %s2568
          %s2570 = sadd.s32 %s28, %s2566
          %s2571 = smul.addr %s26, 2
          %s2572 = sadd.s32 %s2570, %s2571
          %s2573 = smul.addr %s2572, 128
          %s2574 = scalar_lea.hbm %s4, %s2573
          %s2575 = sshll.u32 %s2505, 4
          %s2576 = int_to_ptr.vmem [resolvable:$true] %s2575
          %2581 = dma.vmem_to_hbm [thread:$0]  %s2576, 256, %s2574, %s2502, 128, 128, 8
        $region69: #{a_call__.1} parent=11 // pred_fallthru
          _
      $region12: #{a_call__.1} parent=5 // pred_fallthru
        _
      %p2582 = scmp.le.s32.totalorder 1, %s20
      // Predicated region
      $region70: #{a_call__.1} parent=5 // pred_check
        %p2583 = pneg %p2582
      $region71: #{a_call__.1} parent=5 // pred_check_branch
        %2585 = sbr.rel (%p2583) target = $region73
      $region72: #{a_call__.1} parent=5 // pred_region
        %s2586 = ssub.s32 %s20, 1
        // Predicated region
        $region74: #{a_call__.1} parent=72 // pred_check
          %p2587 = pneg %p61
        $region75: #{a_call__.1} parent=72 // pred_check_branch
          %2589 = sbr.rel (%p2587) target = $region77
        $region76: #{a_call__.1} parent=72 // pred_region
          %s2590 = sand.u32 %s52, 1
          %s2591 = scalar_lea.sflag [#allocation5], %s2590
          %s2592 = sand.u32 %s52, 1
          %s2593 = smul.addr %s2592, 16
          %s2594 = scalar_lea.vmem [#allocation4], %s2593
          %2595 = dma.done %s2591, 256
        $region77: #{a_call__.1} parent=72 // pred_fallthru
          _
        // Predicated region
        $region78: #{a_call__.1} parent=72 // pred_check
          %p2596 = pneg %p84
        $region79: #{a_call__.1} parent=72 // pred_check_branch
          %2598 = sbr.rel (%p2596) target = $region81
        $region80: #{a_call__.1} parent=72 // pred_region
          %s2599 = sand.u32 %s25, 1
          %s2600 = scalar_lea.sflag [#allocation7], %s2599
          %s2601 = sand.u32 %s75, 1
          %s2602 = smul.addr %s2601, 16
          %s2603 = scalar_lea.vmem [#allocation6], %s2602
          %2604 = dma.done %s2600, 256
        $region81: #{a_call__.1} parent=72 // pred_fallthru
          _
        // Predicated region
        $region82: #{a_call__.1} parent=72 // pred_check
          %p2605 = pneg %p107
        $region83: #{a_call__.1} parent=72 // pred_check_branch
          %2607 = sbr.rel (%p2605) target = $region85
        $region84: #{a_call__.1} parent=72 // pred_region
          %s2608 = sand.u32 %s25, 1
          %s2609 = scalar_lea.sflag [#allocation7], %s2608
          %s2610 = sand.u32 %s98, 1
          %s2611 = smul.addr %s2610, 16
          %s2612 = scalar_lea.vmem [#allocation8], %s2611
          %2613 = dma.done %s2609, 256
        $region85: #{a_call__.1} parent=72 // pred_fallthru
          _
        // Predicated region
        $region86: #{a_call__.1} parent=72 // pred_check
          %p2614 = pneg %p130
        $region87: #{a_call__.1} parent=72 // pred_check_branch
          %2616 = sbr.rel (%p2614) target = $region89
        $region88: #{a_call__.1} parent=72 // pred_region
          %s2617 = sand.u32 %s121, 1
          %s2618 = scalar_lea.sflag [#allocation10], %s2617
          %s2619 = sand.u32 %s121, 1
          %s2620 = smul.addr %s2619, 16
          %s2621 = scalar_lea.vmem [#allocation9], %s2620
          %2622 = dma.done %s2618, 256
        $region89: #{a_call__.1} parent=72 // pred_fallthru
          _
      $region73: #{a_call__.1} parent=5 // pred_fallthru
        _
    $region6: #{a_call__.1} parent=1 // loop_footer
      %s24 = sadd.s32 1, %s20
    $region7: #{a_call__.1} parent=1 // loop_footer_branch
      %19 = sbr.rel target = $region3
    $region8: #{a_call__.1} parent=1 // loop_exit
      _
    %2623 = vsyncpa [#allocation5], 1
    %s2624 = scalar_lea.sflag [#allocation5], 1
    %2625 = vsyncpa %s2624, 1
    %2626 = vsyncpa [#allocation7], 1
    %s2627 = scalar_lea.sflag [#allocation7], 1
    %2628 = vsyncpa %s2627, 1
    %2629 = vsyncpa [#allocation10], 1
    %s2630 = scalar_lea.sflag [#allocation10], 1
    %2631 = vsyncpa %s2630, 1
  %2632 = vsyncmov [#allocation3]
  %s2633 = vpop.sfrf %2632
  %p2634 = scmp.eq.s32.totalorder %s2633, 0
  %p2635 = pneg %p2634
  %2637 = shalt.err (%p2635)

</llo_original>
